<compile_context>
chip_gen: v5e
topology: v5e:2x2
jax: 0.10.0
libtpu: 0.0.40
codegen_flags: <defaults>
</compile_context>

<pallas_src>
import math

import numpy as np
import jax
import jax.numpy as jnp
from jax.experimental import pallas as pl
from jax.experimental.pallas import tpu as pltpu

FP8_E4M3 = jnp.float8_e4m3fn
FP8_E4M3_MAX = 448.0
BLOCK = 128                       # quant block (features for x, output rows for W)
_VMEM_TARGET = 40 * 1024 * 1024   # working-set target per kernel (v7x-safe)
_VMEM_CAP = 56 * 1024 * 1024


def _round_up(a, b):
    return (a + b - 1) // b * b


# ---------------------------------------------------------------------------
# Stage 1: activation quantization (per-row, per-128-feature block)
# ---------------------------------------------------------------------------
def act_quant_kernel(x_ref, xq_ref, xs_ref):
    nkb = x_ref.shape[1] // BLOCK
    for b in range(nkb):                              # static unroll
        lo = b * BLOCK
        blk = x_ref[:, lo:lo + BLOCK]                 # (tm1, 128) f32
        amax = jnp.max(jnp.abs(blk), axis=-1, keepdims=True)   # (tm1, 1)
        # NOTE: all-zero blocks get s=1 (the PyTorch reference would 0/0 NaN);
        # deliberate, documented divergence.
        s = jnp.where(amax > 0.0, amax / FP8_E4M3_MAX, 1.0)
        xq_ref[:, lo:lo + BLOCK] = (blk / s).astype(FP8_E4M3)
        xs_ref[:, b:b + 1] = s                        # lane-dense (tm1, K/128) layout


# ---------------------------------------------------------------------------
# Stage 2: fp8 GEMM with activation scales folded into the LHS, plus bias
# ---------------------------------------------------------------------------
def fp8_gemm_bias_kernel(xq_ref, xs_ref, wt_ref, ws_ref, b_ref, o_ref, acc_ref):
    k = pl.program_id(2)

    @pl.when(k == 0)
    def _init():
        acc_ref[...] = jnp.zeros_like(acc_ref)

    tk = xq_ref.shape[1]
    nkb_full = xs_ref.shape[1]
    nbt = tk // BLOCK

    # Per-row activation scales for the nbt 128-K blocks of this k step.
    # The scale strip (tm, K/128) is resident across k (index_map -> (i, 0)).
    if nbt == nkb_full:                               # tk == K: static view
        xs_cols = xs_ref[...]                         # (tm, nbt) f32
    else:                                             # deep-K: dynamic window
        start = pl.multiple_of(k * nbt, nbt)
        xs_cols = xs_ref[:, pl.ds(start, nbt)]

    # Fold the per-row activation scale into the LHS (scale applied in f32,
    # ONE bf16 cast) and issue a single tk-deep MXU contraction per grid step.
    pieces = []
    for b in range(nbt):                              # static unroll (<= 16)
        lo = b * BLOCK
        s_col = xs_cols[:, b:b + 1]                   # (tm, 1) f32
        # fp8 -> bf16 and bf16 -> f32 are exact widenings.
        xb = xq_ref[:, lo:lo + BLOCK].astype(jnp.bfloat16).astype(jnp.float32)
        pieces.append((xb * s_col).astype(jnp.bfloat16))
    lhs = pieces[0] if nbt == 1 else jnp.concatenate(pieces, axis=1)  # (tm, tk) bf16

    # TODO(synk): on v7x the MXU takes fp8 natively; the RHS bf16 cast could be
    # dropped there (the LHS must stay >= bf16 since it carries the act scale).
    rhs = wt_ref[...].astype(jnp.bfloat16)            # (tk, tn) bf16

    acc_ref[...] += jax.lax.dot_general(
        lhs, rhs, (((1,), (0,)), ((), ())),
        preferred_element_type=jnp.float32)

    @pl.when(k == pl.num_programs(2) - 1)
    def _finish():
        # Per-128-output-column weight scale + bias, applied once per out tile.
        o_ref[...] = acc_ref[...] * ws_ref[...] + b_ref[...]


# ---------------------------------------------------------------------------
# Tile / VMEM sizing
# ---------------------------------------------------------------------------
def _stage1_vmem_bytes(tm1, K, nkb):
    return int(2 * tm1 * K * 4                        # x f32 in (double buffered)
               + 2 * tm1 * K                          # x_q fp8 out
               + 2 * tm1 * _round_up(nkb, 128) * 4    # scales out (lane-padded)
               + tm1 * K * 4)                         # in-kernel temporaries


def _gemm_vmem_bytes(tm, tn, tk, nkb, wbufs=2):
    return int(2 * tm * tk                            # x_q fp8
               + 2 * tm * _round_up(nkb, 128) * 4     # act scales (resident)
               + wbufs * tk * tn                      # W^T fp8
               + 2 * 2 * 8 * tn * 4                   # W-scale + bias rows
               + 2 * tm * tn * 4                      # output tile
               + tm * tn * 4                          # f32 accumulator
               + tm * tk * 6 + tk * tn * 2)           # f32/bf16 temporaries


def _choose_gemm_tiles(M, N, K):
    # tm: multiple of 32 (clean fp8 (32,128) packing); single padded block for
    # small M, otherwise a multiple of 128 (keeps the scale-strip lane dim legal).
    if M <= 512:
        tm = _round_up(max(M, 32), 32)
        m_pad = tm
    else:
        best = None
        for c in (512, 256, 128):
            mp = _round_up(M, c)
            if best is None or mp < best[1]:
                best = (c, mp)
        tm, m_pad = best
    # tk: full K when it comfortably fits, otherwise a deep 1024/2048 slab.
    if K <= 4096:
        tk = K
    elif K % 2048 == 0:
        tk = 2048
    elif K % 1024 == 0:
        tk = 1024
    else:
        tk = K  # TODO(synk): pad K for odd, very large in_features
    # tn: as large as divides N.
    tn = BLOCK
    for c in (1024, 512, 256):
        if N % c == 0:
            tn = c
            break
    # v7x has 2 TensorCores: keep >=2 blocks on a parallel axis when possible.
    if m_pad // tm == 1:
        while N // tn == 1 and tn > BLOCK and N % (tn // 2) == 0:
            tn //= 2
    # Trim to the VMEM budget.
    nkb = K // BLOCK
    while (_gemm_vmem_bytes(tm, tn, tk, nkb) > _VMEM_TARGET
           and tn > BLOCK and N % (tn // 2) == 0):
        tn //= 2
    while (_gemm_vmem_bytes(tm, tn, tk, nkb) > _VMEM_TARGET
           and tk > 1024 and (tk // 2) % BLOCK == 0 and K % (tk // 2) == 0):
        tk //= 2
    return tm, m_pad, tn, tk


# ---------------------------------------------------------------------------
# Wrapper: one-time parameter relayout + jitted forward
# ---------------------------------------------------------------------------
def fp8_linear_prepare(w_q, w_scale, bias=None):
    """One-time parameter relayout (module init) -- hoisted out of forward."""
    N, K = w_q.shape
    assert K % BLOCK == 0 and N % BLOCK == 0, \
        "in_features / out_features must be multiples of the 128 quant block"
    w_t = jnp.transpose(w_q)                                          # (K, N) fp8
    ws_row = jnp.repeat(w_scale.astype(jnp.float32), BLOCK)[:N].reshape(1, N)
    if bias is None:
        bias_row = jnp.zeros((1, N), jnp.float32)
    else:
        bias_row = bias.reshape(1, N).astype(jnp.float32)
    return w_t, ws_row, bias_row


@jax.jit
def fp8_linear_forward(x, w_t, ws_row, bias_row):
    """x: (..., K) float; w_t: (K, N) fp8; ws_row/bias_row: (1, N) f32."""
    orig_shape = x.shape
    K, N = w_t.shape
    assert orig_shape[-1] == K
    M = int(np.prod(orig_shape[:-1]))

    tm, m_pad, tn, tk = _choose_gemm_tiles(M, N, K)
    nkb = K // BLOCK

    x2 = x.reshape(M, K).astype(jnp.float32)
    if m_pad > M:
        x2 = jnp.pad(x2, ((0, m_pad - M), (0, 0)))

    # ---- Stage 1: act_quant (pure mem-bound, big row tiles, full-K width) ---
    tm1 = tm
    while (tm1 * 2 <= 1024 and m_pad % (tm1 * 2) == 0
           and _stage1_vmem_bytes(tm1 * 2, K, nkb) <= _VMEM_TARGET):
        tm1 *= 2
    while (_stage1_vmem_bytes(tm1, K, nkb) > _VMEM_TARGET
           and tm1 > 32 and tm1 % 16 == 0 and m_pad % (tm1 // 2) == 0):
        tm1 //= 2
    vmem1 = min(_VMEM_CAP,
                max(32 << 20, int(1.5 * _stage1_vmem_bytes(tm1, K, nkb)) + (4 << 20)))

    x_q, x_s = pl.pallas_call(
        act_quant_kernel,
        out_shape=(jax.ShapeDtypeStruct((m_pad, K), FP8_E4M3),
                   jax.ShapeDtypeStruct((m_pad, nkb), jnp.float32)),
        grid_spec=pltpu.PrefetchScalarGridSpec(
            num_scalar_prefetch=0,
            grid=(m_pad // tm1,),
            in_specs=[pl.BlockSpec((tm1, K), lambda i: (i, 0))],
            out_specs=[pl.BlockSpec((tm1, K), lambda i: (i, 0)),
                       pl.BlockSpec((tm1, nkb), lambda i: (i, 0))],
        ),
        compiler_params=pltpu.CompilerParams(
            dimension_semantics=("parallel",),
            vmem_limit_bytes=vmem1),
    )(x2)

    # ---- Stage 2: GEMM (bf16 MXU operands, f32 accumulation) ----------------
    # Deeper weight pipeline only for decode-like shapes (tiny M, multi-step K).
    wbufs = 3 if (tm <= 64 and K // tk >= 2) else 2
    w_kwargs = {} if wbufs == 2 else dict(pipeline_mode=pl.Buffered(wbufs))
    w_spec = pl.BlockSpec((tk, tn), lambda i, j, k: (k, j), **w_kwargs)
    vmem2 = min(_VMEM_CAP,
                max(32 << 20,
                    int(1.5 * _gemm_vmem_bytes(tm, tn, tk, nkb, wbufs)) + (4 << 20)))

    out = pl.pallas_call(
        fp8_gemm_bias_kernel,
        out_shape=jax.ShapeDtypeStruct((m_pad, N), jnp.float32),
        grid_spec=pltpu.PrefetchScalarGridSpec(
            num_scalar_prefetch=0,
            grid=(m_pad // tm, N // tn, K // tk),
            in_specs=[
                pl.BlockSpec((tm, tk), lambda i, j, k: (i, k)),    # x_q fp8
                pl.BlockSpec((tm, nkb), lambda i, j, k: (i, 0)),   # act scales, k-resident
                w_spec,                                            # W^T fp8
                pl.BlockSpec((1, tn), lambda i, j, k: (0, j)),     # dense W scales
                pl.BlockSpec((1, tn), lambda i, j, k: (0, j)),     # bias
            ],
            out_specs=pl.BlockSpec((tm, tn), lambda i, j, k: (i, j)),
            scratch_shapes=[pltpu.VMEM((tm, tn), jnp.float32)],
        ),
        compiler_params=pltpu.CompilerParams(
            dimension_semantics=("parallel", "parallel", "arbitrary"),
            vmem_limit_bytes=vmem2),
    )(x_q, x_s, w_t, ws_row, bias_row)

    out = out[:M]
    return out.reshape(*orig_shape[:-1], N)


def fp8_linear(x, w_q, w_scale, bias=None):
    """Convenience wrapper (prepare runs once per call here; a real module
    would call fp8_linear_prepare once at init and reuse the results)."""
    return fp8_linear_forward(x, *fp8_linear_prepare(w_q, w_scale, bias))


# ---------------------------------------------------------------------------
# Pure-JAX reference with identical fp8 round-trip semantics
# ---------------------------------------------------------------------------
def fp8_linear_ref(x, w_q, w_scale, bias):
    orig_shape = x.shape
    K = orig_shape[-1]
    N = w_q.shape[0]
    xb = x.reshape(-1, K // BLOCK, BLOCK).astype(jnp.float32)
    amax = jnp.max(jnp.abs(xb), axis=-1, keepdims=True)
    s = jnp.where(amax > 0.0, amax / FP8_E4M3_MAX, 1.0)
    x_deq = ((xb / s).astype(FP8_E4M3).astype(jnp.float32) * s).reshape(-1, K)
    ws = jnp.repeat(w_scale.astype(jnp.float32), BLOCK)[:N]
    w_deq = w_q.astype(jnp.float32) * ws[:, None]
    y = jnp.dot(x_deq, w_deq.T, precision=jax.lax.Precision.HIGHEST) + bias
    return y.reshape(*orig_shape[:-1], N)


if __name__ == "__main__":
    # Small shapes consistent with the module: tokens = batch*seq, hidden = in_f.
    batch, seq = 2, 8
    in_f, out_f = 256, 256

    key = jax.random.PRNGKey(0)
    kx, kw, ks, kb = jax.random.split(key, 4)

    x = jax.random.normal(kx, (batch, seq, in_f), dtype=jnp.float32)

    # Xavier-uniform weights stored as fp8 e4m3 (as in reset_parameters), with
    # non-trivial scales / bias to exercise the dequant + bias paths.
    bound = math.sqrt(6.0 / (in_f + out_f))
    w_f32 = jax.random.uniform(kw, (out_f, in_f), minval=-bound, maxval=bound,
                               dtype=jnp.float32)
    w_q = w_f32.astype(FP8_E4M3)
    num_blocks = math.ceil(out_f / BLOCK)
    w_scale = jax.random.uniform(ks, (num_blocks,), minval=0.5, maxval=1.5,
                                 dtype=jnp.float32)
    bias = 0.1 * jax.random.normal(kb, (out_f,), dtype=jnp.float32)

    # One-time parameter relayout (== module init), then the forward pass.
    w_t, ws_row, bias_row = fp8_linear_prepare(w_q, w_scale, bias)
    y = fp8_linear_forward(x, w_t, ws_row, bias_row)
    y = jax.block_until_ready(y)

    y_ref = fp8_linear_ref(x, w_q, w_scale, bias)
    np.testing.assert_allclose(np.asarray(y), np.asarray(y_ref),
                               rtol=2e-2, atol=2e-2)
    print("KERNEL_OK")
</pallas_src>

<mosaic_0001>
module attributes {stable_mosaic.version = 11 : i64} {
  func.func @fp8_gemm_bias_kernel(%arg0: i32, %arg1: i32, %arg2: i32, %arg3: memref<32x256xf8E4M3FN, #tpu.memory_space<vmem>>, %arg4: memref<32x2xf32, #tpu.memory_space<vmem>>, %arg5: memref<256x128xf8E4M3FN, #tpu.memory_space<vmem>>, %arg6: memref<1x128xf32, #tpu.memory_space<vmem>>, %arg7: memref<1x128xf32, #tpu.memory_space<vmem>>, %arg8: memref<32x128xf32, #tpu.memory_space<vmem>>, %arg9: memref<32x128xf32, #tpu.memory_space<vmem>>) attributes {dimension_semantics = [#tpu.dimension_semantics<parallel>, #tpu.dimension_semantics<parallel>, #tpu.dimension_semantics<arbitrary>], iteration_bounds = array<i64: 1, 2, 1>, scalar_prefetch = 0 : i64, scratch_operands = 1 : i64, tpu.core_type = #tpu.core_type<tc>, window_params = [{transform_indices = @transform_0, window_bounds = array<i64: 32, 256>}, {transform_indices = @transform_1, window_bounds = array<i64: 32, 2>}, {transform_indices = @transform_2, window_bounds = array<i64: 256, 128>}, {transform_indices = @transform_3, window_bounds = array<i64: 1, 128>}, {transform_indices = @transform_4, window_bounds = array<i64: 1, 128>}, {transform_indices = @transform_5, window_bounds = array<i64: 32, 128>}]} {
    %c0_i32 = arith.constant 0 : i32
    %0 = arith.cmpi eq, %arg2, %c0_i32 : i32
    %1 = arith.extui %0 : i1 to i32
    %c0_i32_0 = arith.constant 0 : i32
    %2 = arith.cmpi ne, %1, %c0_i32_0 : i32
    scf.if %2 {
      %cst_13 = arith.constant 0.000000e+00 : f32
      %28 = vector.broadcast %cst_13 : f32 to vector<32x128xf32>
      %c0_14 = arith.constant 0 : index
      %c0_15 = arith.constant 0 : index
      %29 = vector.load %arg9[%c0_14, %c0_15] : memref<32x128xf32, #tpu.memory_space<vmem>>, vector<32x128xf32>
      tpu.vector_store %arg9[%c0_14, %c0_15], %28 {strides = array<i32>} : memref<32x128xf32, #tpu.memory_space<vmem>>, vector<32x128xf32>,
    } else {
    }
    %c0 = arith.constant 0 : index
    %c0_1 = arith.constant 0 : index
    %3 = vector.load %arg4[%c0, %c0_1] : memref<32x2xf32, #tpu.memory_space<vmem>>, vector<32x2xf32>
    %4 = vector.extract_strided_slice %3 {offsets = [0, 0], sizes = [32, 1], strides = [1, 1]} : vector<32x2xf32> to vector<32x1xf32>
    %c0_2 = arith.constant 0 : index
    %c0_3 = arith.constant 0 : index
    %5 = vector.load %arg3[%c0_2, %c0_3] : memref<32x256xf8E4M3FN, #tpu.memory_space<vmem>>, vector<32x128xf8E4M3FN>
    %6 = arith.extf %5 : vector<32x128xf8E4M3FN> to vector<32x128xbf16>
    %7 = arith.extf %6 : vector<32x128xbf16> to vector<32x128xf32>
    %8 = vector.broadcast %4 : vector<32x1xf32> to vector<32x128xf32>
    %9 = arith.mulf %7, %8 : vector<32x128xf32>
    %10 = arith.truncf %9 : vector<32x128xf32> to vector<32x128xbf16>
    %11 = vector.extract_strided_slice %3 {offsets = [0, 1], sizes = [32, 1], strides = [1, 1]} : vector<32x2xf32> to vector<32x1xf32>
    %c0_4 = arith.constant 0 : index
    %c128 = arith.constant 128 : index
    %12 = vector.load %arg3[%c0_4, %c128] : memref<32x256xf8E4M3FN, #tpu.memory_space<vmem>>, vector<32x128xf8E4M3FN>
    %13 = arith.extf %12 : vector<32x128xf8E4M3FN> to vector<32x128xbf16>
    %14 = arith.extf %13 : vector<32x128xbf16> to vector<32x128xf32>
    %15 = vector.broadcast %11 : vector<32x1xf32> to vector<32x128xf32>
    %16 = arith.mulf %14, %15 : vector<32x128xf32>
    %17 = arith.truncf %16 : vector<32x128xf32> to vector<32x128xbf16>
    %18 = tpu.concatenate %10, %17 in 1 : vector<32x128xbf16>, vector<32x128xbf16> -> vector<32x256xbf16>
    %c0_5 = arith.constant 0 : index
    %c0_6 = arith.constant 0 : index
    %19 = vector.load %arg5[%c0_5, %c0_6] : memref<256x128xf8E4M3FN, #tpu.memory_space<vmem>>, vector<256x128xf8E4M3FN>
    %20 = arith.extf %19 : vector<256x128xf8E4M3FN> to vector<256x128xbf16>
    %c0_7 = arith.constant 0 : index
    %c0_8 = arith.constant 0 : index
    %21 = vector.load %arg9[%c0_7, %c0_8] : memref<32x128xf32, #tpu.memory_space<vmem>>, vector<32x128xf32>
    %cst = arith.constant dense<0.000000e+00> : vector<32x128xf32>
    %22 = tpu.matmul %18, %20, %cst {dimension_numbers = #tpu.dot_dimension_numbers<[1], [0], [0], [1], [0, 0, 1, 1], [], []>} : vector<32x256xbf16>, vector<256x128xbf16>, vector<32x128xf32> -> vector<32x128xf32>
    %23 = arith.addf %21, %22 : vector<32x128xf32>
    %c0_9 = arith.constant 0 : index
    %c0_10 = arith.constant 0 : index
    %24 = vector.load %arg9[%c0_9, %c0_10] : memref<32x128xf32, #tpu.memory_space<vmem>>, vector<32x128xf32>
    tpu.vector_store %arg9[%c0_9, %c0_10], %23 {strides = array<i32>} : memref<32x128xf32, #tpu.memory_space<vmem>>, vector<32x128xf32>,
    %c0_i32_11 = arith.constant 0 : i32
    %25 = arith.cmpi eq, %arg2, %c0_i32_11 : i32
    %26 = arith.extui %25 : i1 to i32
    %c0_i32_12 = arith.constant 0 : i32
    %27 = arith.cmpi ne, %26, %c0_i32_12 : i32
    scf.if %27 {
      %c0_13 = arith.constant 0 : index
      %c0_14 = arith.constant 0 : index
      %28 = vector.load %arg9[%c0_13, %c0_14] : memref<32x128xf32, #tpu.memory_space<vmem>>, vector<32x128xf32>
      %c0_15 = arith.constant 0 : index
      %c0_16 = arith.constant 0 : index
      %29 = vector.load %arg6[%c0_15, %c0_16] : memref<1x128xf32, #tpu.memory_space<vmem>>, vector<1x128xf32>
      %30 = vector.broadcast %29 : vector<1x128xf32> to vector<32x128xf32>
      %31 = arith.mulf %28, %30 : vector<32x128xf32>
      %c0_17 = arith.constant 0 : index
      %c0_18 = arith.constant 0 : index
      %32 = vector.load %arg7[%c0_17, %c0_18] : memref<1x128xf32, #tpu.memory_space<vmem>>, vector<1x128xf32>
      %33 = vector.broadcast %32 : vector<1x128xf32> to vector<32x128xf32>
      %34 = arith.addf %31, %33 : vector<32x128xf32>
      %c0_19 = arith.constant 0 : index
      %c0_20 = arith.constant 0 : index
      %35 = vector.load %arg8[%c0_19, %c0_20] : memref<32x128xf32, #tpu.memory_space<vmem>>, vector<32x128xf32>
      tpu.vector_store %arg8[%c0_19, %c0_20], %34 {strides = array<i32>} : memref<32x128xf32, #tpu.memory_space<vmem>>, vector<32x128xf32>,
    } else {
    }
    return
  }
  func.func @transform_0(%arg0: i32, %arg1: i32, %arg2: i32) -> (i32, i32) {
    %c0_i32 = arith.constant 0 : i32
    return %arg0, %arg2 : i32, i32
  }
  func.func @transform_1(%arg0: i32, %arg1: i32, %arg2: i32) -> (i32, i32) {
    %c0_i32 = arith.constant 0 : i32
    %c0_i32_0 = arith.constant 0 : i32
    return %arg0, %c0_i32 : i32, i32
  }
  func.func @transform_2(%arg0: i32, %arg1: i32, %arg2: i32) -> (i32, i32) {
    %c0_i32 = arith.constant 0 : i32
    return %arg2, %arg1 : i32, i32
  }
  func.func @transform_3(%arg0: i32, %arg1: i32, %arg2: i32) -> (i32, i32) {
    %c0_i32 = arith.constant 0 : i32
    %c0_i32_0 = arith.constant 0 : i32
    return %c0_i32, %arg1 : i32, i32
  }
  func.func @transform_4(%arg0: i32, %arg1: i32, %arg2: i32) -> (i32, i32) {
    %c0_i32 = arith.constant 0 : i32
    %c0_i32_0 = arith.constant 0 : i32
    return %c0_i32, %arg1 : i32, i32
  }
  func.func @transform_5(%arg0: i32, %arg1: i32, %arg2: i32) -> (i32, i32) {
    %c0_i32 = arith.constant 0 : i32
    return %arg0, %arg1 : i32, i32
  }
}

module attributes {stable_mosaic.version = 11 : i64} {
  func.func @act_quant_kernel(%arg0: i32, %arg1: memref<32x256xf32, #tpu.memory_space<vmem>>, %arg2: memref<32x256xf8E4M3FN, #tpu.memory_space<vmem>>, %arg3: memref<32x2xf32, #tpu.memory_space<vmem>>) attributes {dimension_semantics = [#tpu.dimension_semantics<parallel>], iteration_bounds = array<i64: 1>, scalar_prefetch = 0 : i64, scratch_operands = 0 : i64, tpu.core_type = #tpu.core_type<tc>, window_params = [{transform_indices = @transform_0, window_bounds = array<i64: 32, 256>}, {transform_indices = @transform_1, window_bounds = array<i64: 32, 256>}, {transform_indices = @transform_2, window_bounds = array<i64: 32, 2>}]} {
    %c0 = arith.constant 0 : index
    %c0_0 = arith.constant 0 : index
    %0 = vector.load %arg1[%c0, %c0_0] : memref<32x256xf32, #tpu.memory_space<vmem>>, vector<32x128xf32>
    %1 = math.absf %0 : vector<32x128xf32>
    %cst = arith.constant dense<0xFF800000> : vector<32xf32>
    %2 = vector.multi_reduction <maximumf>, %1, %cst [1] : vector<32x128xf32> to vector<32xf32>
    %3 = vector.shape_cast %2 : vector<32xf32> to vector<32x1xf32>
    %cst_1 = arith.constant 0.000000e+00 : f32
    %4 = vector.broadcast %cst_1 : f32 to vector<32x1xf32>
    %5 = arith.cmpf ogt, %3, %4 : vector<32x1xf32>
    %cst_2 = arith.constant 4.480000e+02 : f32
    %6 = vector.broadcast %cst_2 : f32 to vector<32x1xf32>
    %7 = arith.divf %3, %6 : vector<32x1xf32>
    %cst_3 = arith.constant 1.000000e+00 : f32
    %8 = vector.broadcast %cst_3 : f32 to vector<32x1xf32>
    %9 = arith.select %5, %7, %8 : vector<32x1xi1>, vector<32x1xf32>
    %10 = vector.broadcast %9 : vector<32x1xf32> to vector<32x128xf32>
    %11 = arith.divf %0, %10 : vector<32x128xf32>
    %12 = arith.truncf %11 : vector<32x128xf32> to vector<32x128xf8E4M3FN>
    %c0_4 = arith.constant 0 : index
    %c0_5 = arith.constant 0 : index
    %13 = vector.load %arg2[%c0_4, %c0_5] : memref<32x256xf8E4M3FN, #tpu.memory_space<vmem>>, vector<32x128xf8E4M3FN>
    tpu.vector_store %arg2[%c0_4, %c0_5], %12 {strides = array<i32>} : memref<32x256xf8E4M3FN, #tpu.memory_space<vmem>>, vector<32x128xf8E4M3FN>,
    %c0_6 = arith.constant 0 : index
    %c0_7 = arith.constant 0 : index
    %14 = vector.load %arg3[%c0_6, %c0_7] : memref<32x2xf32, #tpu.memory_space<vmem>>, vector<32x1xf32>
    tpu.vector_store %arg3[%c0_6, %c0_7], %9 {strides = array<i32>} : memref<32x2xf32, #tpu.memory_space<vmem>>, vector<32x1xf32>,
    %c0_8 = arith.constant 0 : index
    %c128 = arith.constant 128 : index
    %15 = vector.load %arg1[%c0_8, %c128] : memref<32x256xf32, #tpu.memory_space<vmem>>, vector<32x128xf32>
    %16 = math.absf %15 : vector<32x128xf32>
    %cst_9 = arith.constant dense<0xFF800000> : vector<32xf32>
    %17 = vector.multi_reduction <maximumf>, %16, %cst_9 [1] : vector<32x128xf32> to vector<32xf32>
    %18 = vector.shape_cast %17 : vector<32xf32> to vector<32x1xf32>
    %cst_10 = arith.constant 0.000000e+00 : f32
    %19 = vector.broadcast %cst_10 : f32 to vector<32x1xf32>
    %20 = arith.cmpf ogt, %18, %19 : vector<32x1xf32>
    %cst_11 = arith.constant 4.480000e+02 : f32
    %21 = vector.broadcast %cst_11 : f32 to vector<32x1xf32>
    %22 = arith.divf %18, %21 : vector<32x1xf32>
    %cst_12 = arith.constant 1.000000e+00 : f32
    %23 = vector.broadcast %cst_12 : f32 to vector<32x1xf32>
    %24 = arith.select %20, %22, %23 : vector<32x1xi1>, vector<32x1xf32>
    %25 = vector.broadcast %24 : vector<32x1xf32> to vector<32x128xf32>
    %26 = arith.divf %15, %25 : vector<32x128xf32>
    %27 = arith.truncf %26 : vector<32x128xf32> to vector<32x128xf8E4M3FN>
    %c0_13 = arith.constant 0 : index
    %c128_14 = arith.constant 128 : index
    %28 = vector.load %arg2[%c0_13, %c128_14] : memref<32x256xf8E4M3FN, #tpu.memory_space<vmem>>, vector<32x128xf8E4M3FN>
    tpu.vector_store %arg2[%c0_13, %c128_14], %27 {strides = array<i32>} : memref<32x256xf8E4M3FN, #tpu.memory_space<vmem>>, vector<32x128xf8E4M3FN>,
    %c0_15 = arith.constant 0 : index
    %c1 = arith.constant 1 : index
    %29 = vector.load %arg3[%c0_15, %c1] : memref<32x2xf32, #tpu.memory_space<vmem>>, vector<32x1xf32>
    tpu.vector_store %arg3[%c0_15, %c1], %24 {strides = array<i32>} : memref<32x2xf32, #tpu.memory_space<vmem>>, vector<32x1xf32>,
    return
  }
  func.func @transform_0(%arg0: i32) -> (i32, i32) {
    %c0_i32 = arith.constant 0 : i32
    %c0_i32_0 = arith.constant 0 : i32
    return %arg0, %c0_i32 : i32, i32
  }
  func.func @transform_1(%arg0: i32) -> (i32, i32) {
    %c0_i32 = arith.constant 0 : i32
    %c0_i32_0 = arith.constant 0 : i32
    return %arg0, %c0_i32 : i32, i32
  }
  func.func @transform_2(%arg0: i32) -> (i32, i32) {
    %c0_i32 = arith.constant 0 : i32
    %c0_i32_0 = arith.constant 0 : i32
    return %arg0, %c0_i32 : i32, i32
  }
}

</mosaic_0001>

<llo_original>
// kernel: fp8_linear_forward.2
$region0: #{fp8_linear_forward.2}
  #allocation0 [shape = 'u32[]', space=smem, size = 0x4, offset = 0x4, fixed_abs, tag = 'smem constant byte address 0x4 - core index']
  #allocation1 [shape = 'u32[72,128]{1,0:T(1,128)}', space=vmem, size = 0x9000, scoped, tag = 'internal scratch']
  %s0 = inlined_call_operand.vmem [shape: f32[32,256], index: 0, kind: input, shape index: {}]
  %s1 = inlined_call_operand.vmem [shape: f8e4m3fn[32,256], index: 1, kind: output, shape index: {0}]
  %s2 = inlined_call_operand.vmem [shape: f32[32,2], index: 2, kind: output, shape index: {1}]
  %3 = xla_tuple %s1, %s2
  %s4 = sld [smem:[#allocation0]]
  $region22: #{fp8_linear_forward.2} parent=0
    _
  %s6 = ssub.s32 1, %s4
  %s7 = scalar_select 0, %s6, %s4
  // Predicated region
  $region2: #{fp8_linear_forward.2} parent=0 // pred_check
    _
  $region3: #{fp8_linear_forward.2} parent=0 // pred_check_branch
    %9 = sbr.rel (0) target = $region5
  $region4: #{fp8_linear_forward.2} parent=0 // pred_region
    _
  $region5: #{fp8_linear_forward.2} parent=0 // pred_fallthru
    _
  %v10 = vld [vmem:[%s0] sm:$0xff]
  %v11 = vld [vmem:[%s0 + $0x10] sm:$0xff]
  %v12 = vld [vmem:[%s0 + $0x20] sm:$0xff]
  %v13 = vld [vmem:[%s0 + $0x30] sm:$0xff]
  %v14 = vand.u32 2147483647, %v10
  %v15 = vand.u32 2147483647, %v11
  %v16 = vand.u32 2147483647, %v12
  %v17 = vand.u32 2147483647, %v13
  %18 = vmax.xlane.f32.xlu0 %v14
  %v19 = vpop.xlane.xlu0 %18
  %20 = vmax.xlane.f32.xlu0 %v15
  %v21 = vpop.xlane.xlu0 %20
  %22 = vmax.xlane.f32.xlu0 %v16
  %v23 = vpop.xlane.xlu0 %22
  %24 = vmax.xlane.f32.xlu0 %v17
  %v25 = vpop.xlane.xlu0 %24
  %vm26 = vcmp.gt.f32.partialorder %v19, 0.0
  %vm27 = vcmp.gt.f32.partialorder %v21, 0.0
  %vm28 = vcmp.gt.f32.partialorder %v23, 0.0
  %vm29 = vcmp.gt.f32.partialorder %v25, 0.0
  %v30 = vrcp.pop 448.0
  %v31 = vmul.f32 448.0, %v30
  %v32 = vsub.f32 1.0, %v31
  %v33 = vmul.f32 %v30, %v32
  %v34 = vadd.f32 %v30, %v33
  %vm35 = vweird.f32 %v30
  %v36 = vsel %vm35, %v30, %v34
  %v37 = vmul.f32 %v19, %v36
  %v38 = vmul.f32 %v21, %v36
  %v39 = vmul.f32 %v23, %v36
  %v40 = vmul.f32 %v25, %v36
  %v41 = vsel %vm26, %v37, 1.0
  %v42 = vsel %vm27, %v38, 1.0
  %v43 = vsel %vm28, %v39, 1.0
  %v44 = vsel %vm29, %v40, 1.0
  %v45 = vrcp.pop %v41
  %v46 = vmul.f32 %v41, %v45
  %v47 = vsub.f32 1.0, %v46
  %v48 = vmul.f32 %v45, %v47
  %v49 = vadd.f32 %v45, %v48
  %vm50 = vweird.f32 %v41
  %vm51 = vweird.f32 %v45
  %vm52 = vmor %vm50, %vm51
  %v53 = vsel %vm52, %v45, %v49
  %v54 = vand.u32 2147483647, %v41
  %vm55 = vcmp.eq.f32.partialorder %v54, 8.507059e+37
  %v56 = vand.u32 %v41, 2147483648
  %v57 = vor.u32 1.1754944e-38, %v56
  %v58 = vsel %vm55, %v57, %v53
  %v59 = vmul.f32 %v10, %v58
  %v60 = vrcp.pop %v42
  %v61 = vmul.f32 %v42, %v60
  %v62 = vsub.f32 1.0, %v61
  %v63 = vmul.f32 %v60, %v62
  %v64 = vadd.f32 %v60, %v63
  %vm65 = vweird.f32 %v42
  %vm66 = vweird.f32 %v60
  %vm67 = vmor %vm65, %vm66
  %v68 = vsel %vm67, %v60, %v64
  %v69 = vand.u32 2147483647, %v42
  %vm70 = vcmp.eq.f32.partialorder %v69, 8.507059e+37
  %v71 = vand.u32 %v42, 2147483648
  %v72 = vor.u32 1.1754944e-38, %v71
  %v73 = vsel %vm70, %v72, %v68
  %v74 = vmul.f32 %v11, %v73
  %v75 = vrcp.pop %v43
  %v76 = vmul.f32 %v43, %v75
  %v77 = vsub.f32 1.0, %v76
  %v78 = vmul.f32 %v75, %v77
  %v79 = vadd.f32 %v75, %v78
  %vm80 = vweird.f32 %v43
  %vm81 = vweird.f32 %v75
  %vm82 = vmor %vm80, %vm81
  %v83 = vsel %vm82, %v75, %v79
  %v84 = vand.u32 2147483647, %v43
  %vm85 = vcmp.eq.f32.partialorder %v84, 8.507059e+37
  %v86 = vand.u32 %v43, 2147483648
  %v87 = vor.u32 1.1754944e-38, %v86
  %v88 = vsel %vm85, %v87, %v83
  %v89 = vmul.f32 %v12, %v88
  %v90 = vrcp.pop %v44
  %v91 = vmul.f32 %v44, %v90
  %v92 = vsub.f32 1.0, %v91
  %v93 = vmul.f32 %v90, %v92
  %v94 = vadd.f32 %v90, %v93
  %vm95 = vweird.f32 %v44
  %vm96 = vweird.f32 %v90
  %vm97 = vmor %vm95, %vm96
  %v98 = vsel %vm97, %v90, %v94
  %v99 = vand.u32 2147483647, %v44
  %vm100 = vcmp.eq.f32.partialorder %v99, 8.507059e+37
  %v101 = vand.u32 %v44, 2147483648
  %v102 = vor.u32 1.1754944e-38, %v101
  %v103 = vsel %vm100, %v102, %v98
  %v104 = vmul.f32 %v13, %v103
  %v105 = vand.u32 2147483647, %v59
  %v106 = vmul.f32 %v59, 0.0625
  %v107 = vcvt.f32.f8e4m3b11 %v106
  %vm108 = vweird.f32 %v59
  %v109 = vsel %vm108, 127, %v107
  %v110 = vshrl.u32 %v59, 24
  %v111 = vand.u32 %v110, 128
  %vm112 = vcmp.le.f32.partialorder %v105, 0.0009765625
  %v113 = vsel %vm112, %v111, %v109
  %v114 = vand.u32 2147483647, %v74
  %v115 = vmul.f32 %v74, 0.0625
  %v116 = vcvt.f32.f8e4m3b11 %v115
  %vm117 = vweird.f32 %v74
  %v118 = vsel %vm117, 127, %v116
  %v119 = vshrl.u32 %v74, 24
  %v120 = vand.u32 %v119, 128
  %vm121 = vcmp.le.f32.partialorder %v114, 0.0009765625
  %v122 = vsel %vm121, %v120, %v118
  %v123 = vand.u32 2147483647, %v89
  %v124 = vmul.f32 %v89, 0.0625
  %v125 = vcvt.f32.f8e4m3b11 %v124
  %vm126 = vweird.f32 %v89
  %v127 = vsel %vm126, 127, %v125
  %v128 = vshrl.u32 %v89, 24
  %v129 = vand.u32 %v128, 128
  %vm130 = vcmp.le.f32.partialorder %v123, 0.0009765625
  %v131 = vsel %vm130, %v129, %v127
  %v132 = vand.u32 2147483647, %v104
  %v133 = vmul.f32 %v104, 0.0625
  %v134 = vcvt.f32.f8e4m3b11 %v133
  %vm135 = vweird.f32 %v104
  %v136 = vsel %vm135, 127, %v134
  %v137 = vshrl.u32 %v104, 24
  %v138 = vand.u32 %v137, 128
  %vm139 = vcmp.le.f32.partialorder %v132, 0.0009765625
  %v140 = vsel %vm139, %v138, %v136
  %v141 = vpack.c.b16 %v122, %v113
  %v142 = vpack.c.b16 %v140, %v131
  %v143 = vpack.c.b8 %v142, %v141
  %145 = vst [vmem:[%s1] sm:$0xff] %v143
  %vm146 = vcmask 7168
  %147 = vst.msk [vmem:[%s2] sm:$0xff] %vm146, %v41
  %148 = vst.msk [vmem:[%s2 + $0x8] sm:$0xff] %vm146, %v42
  %149 = vst.msk [vmem:[%s2 + $0x10] sm:$0xff] %vm146, %v43
  %150 = vst.msk [vmem:[%s2 + $0x18] sm:$0xff] %vm146, %v44
  %v151 = vld [vmem:[%s0 + $0x8] sm:$0xff]
  %v152 = vld [vmem:[%s0 + $0x18] sm:$0xff]
  %v153 = vld [vmem:[%s0 + $0x28] sm:$0xff]
  %v154 = vld [vmem:[%s0 + $0x38] sm:$0xff]
  %v155 = vand.u32 2147483647, %v151
  %v156 = vand.u32 2147483647, %v152
  %v157 = vand.u32 2147483647, %v153
  %v158 = vand.u32 2147483647, %v154
  %159 = vmax.xlane.f32.xlu0 %v155
  %v160 = vpop.xlane.xlu0 %159
  %161 = vmax.xlane.f32.xlu0 %v156
  %v162 = vpop.xlane.xlu0 %161
  %163 = vmax.xlane.f32.xlu0 %v157
  %v164 = vpop.xlane.xlu0 %163
  %165 = vmax.xlane.f32.xlu0 %v158
  %v166 = vpop.xlane.xlu0 %165
  %vm167 = vcmp.gt.f32.partialorder %v160, 0.0
  %vm168 = vcmp.gt.f32.partialorder %v162, 0.0
  %vm169 = vcmp.gt.f32.partialorder %v164, 0.0
  %vm170 = vcmp.gt.f32.partialorder %v166, 0.0
  %v171 = vmul.f32 %v160, %v36
  %v172 = vmul.f32 %v162, %v36
  %v173 = vmul.f32 %v164, %v36
  %v174 = vmul.f32 %v166, %v36
  %v175 = vsel %vm167, %v171, 1.0
  %v176 = vsel %vm168, %v172, 1.0
  %v177 = vsel %vm169, %v173, 1.0
  %v178 = vsel %vm170, %v174, 1.0
  %v179 = vrcp.pop %v175
  %v180 = vmul.f32 %v175, %v179
  %v181 = vsub.f32 1.0, %v180
  %v182 = vmul.f32 %v179, %v181
  %v183 = vadd.f32 %v179, %v182
  %vm184 = vweird.f32 %v175
  %vm185 = vweird.f32 %v179
  %vm186 = vmor %vm184, %vm185
  %v187 = vsel %vm186, %v179, %v183
  %v188 = vand.u32 2147483647, %v175
  %vm189 = vcmp.eq.f32.partialorder %v188, 8.507059e+37
  %v190 = vand.u32 %v175, 2147483648
  %v191 = vor.u32 1.1754944e-38, %v190
  %v192 = vsel %vm189, %v191, %v187
  %v193 = vmul.f32 %v151, %v192
  %v194 = vrcp.pop %v176
  %v195 = vmul.f32 %v176, %v194
  %v196 = vsub.f32 1.0, %v195
  %v197 = vmul.f32 %v194, %v196
  %v198 = vadd.f32 %v194, %v197
  %vm199 = vweird.f32 %v176
  %vm200 = vweird.f32 %v194
  %vm201 = vmor %vm199, %vm200
  %v202 = vsel %vm201, %v194, %v198
  %v203 = vand.u32 2147483647, %v176
  %vm204 = vcmp.eq.f32.partialorder %v203, 8.507059e+37
  %v205 = vand.u32 %v176, 2147483648
  %v206 = vor.u32 1.1754944e-38, %v205
  %v207 = vsel %vm204, %v206, %v202
  %v208 = vmul.f32 %v152, %v207
  %v209 = vrcp.pop %v177
  %v210 = vmul.f32 %v177, %v209
  %v211 = vsub.f32 1.0, %v210
  %v212 = vmul.f32 %v209, %v211
  %v213 = vadd.f32 %v209, %v212
  %vm214 = vweird.f32 %v177
  %vm215 = vweird.f32 %v209
  %vm216 = vmor %vm214, %vm215
  %v217 = vsel %vm216, %v209, %v213
  %v218 = vand.u32 2147483647, %v177
  %vm219 = vcmp.eq.f32.partialorder %v218, 8.507059e+37
  %v220 = vand.u32 %v177, 2147483648
  %v221 = vor.u32 1.1754944e-38, %v220
  %v222 = vsel %vm219, %v221, %v217
  %v223 = vmul.f32 %v153, %v222
  %v224 = vrcp.pop %v178
  %v225 = vmul.f32 %v178, %v224
  %v226 = vsub.f32 1.0, %v225
  %v227 = vmul.f32 %v224, %v226
  %v228 = vadd.f32 %v224, %v227
  %vm229 = vweird.f32 %v178
  %vm230 = vweird.f32 %v224
  %vm231 = vmor %vm229, %vm230
  %v232 = vsel %vm231, %v224, %v228
  %v233 = vand.u32 2147483647, %v178
  %vm234 = vcmp.eq.f32.partialorder %v233, 8.507059e+37
  %v235 = vand.u32 %v178, 2147483648
  %v236 = vor.u32 1.1754944e-38, %v235
  %v237 = vsel %vm234, %v236, %v232
  %v238 = vmul.f32 %v154, %v237
  %v239 = vand.u32 2147483647, %v193
  %v240 = vmul.f32 %v193, 0.0625
  %v241 = vcvt.f32.f8e4m3b11 %v240
  %vm242 = vweird.f32 %v193
  %v243 = vsel %vm242, 127, %v241
  %v244 = vshrl.u32 %v193, 24
  %v245 = vand.u32 %v244, 128
  %vm246 = vcmp.le.f32.partialorder %v239, 0.0009765625
  %v247 = vsel %vm246, %v245, %v243
  %v248 = vand.u32 2147483647, %v208
  %v249 = vmul.f32 %v208, 0.0625
  %v250 = vcvt.f32.f8e4m3b11 %v249
  %vm251 = vweird.f32 %v208
  %v252 = vsel %vm251, 127, %v250
  %v253 = vshrl.u32 %v208, 24
  %v254 = vand.u32 %v253, 128
  %vm255 = vcmp.le.f32.partialorder %v248, 0.0009765625
  %v256 = vsel %vm255, %v254, %v252
  %v257 = vand.u32 2147483647, %v223
  %v258 = vmul.f32 %v223, 0.0625
  %v259 = vcvt.f32.f8e4m3b11 %v258
  %vm260 = vweird.f32 %v223
  %v261 = vsel %vm260, 127, %v259
  %v262 = vshrl.u32 %v223, 24
  %v263 = vand.u32 %v262, 128
  %vm264 = vcmp.le.f32.partialorder %v257, 0.0009765625
  %v265 = vsel %vm264, %v263, %v261
  %v266 = vand.u32 2147483647, %v238
  %v267 = vmul.f32 %v238, 0.0625
  %v268 = vcvt.f32.f8e4m3b11 %v267
  %vm269 = vweird.f32 %v238
  %v270 = vsel %vm269, 127, %v268
  %v271 = vshrl.u32 %v238, 24
  %v272 = vand.u32 %v271, 128
  %vm273 = vcmp.le.f32.partialorder %v266, 0.0009765625
  %v274 = vsel %vm273, %v272, %v270
  %v275 = vpack.c.b16 %v256, %v247
  %v276 = vpack.c.b16 %v274, %v265
  %v277 = vpack.c.b8 %v276, %v275
  %279 = vst [vmem:[%s1 + $0x8] sm:$0xff] %v277
  %vm280 = vcmask 15368
  %281 = vst.msk [vmem:[%s2] sm:$0xff] %vm280, %v175
  %282 = vst.msk [vmem:[%s2 + $0x8] sm:$0xff] %vm280, %v176
  %283 = vst.msk [vmem:[%s2 + $0x10] sm:$0xff] %vm280, %v177
  %284 = vst.msk [vmem:[%s2 + $0x18] sm:$0xff] %vm280, %v178
  // Predicated region
  $region6: #{fp8_linear_forward.2} parent=0 // pred_check
    _
  $region7: #{fp8_linear_forward.2} parent=0 // pred_check_branch
    %286 = sbr.rel (0) target = $region9
  $region8: #{fp8_linear_forward.2} parent=0 // pred_region
    _
  $region9: #{fp8_linear_forward.2} parent=0 // pred_fallthru
    _
  // Predicated region
  $region10: #{fp8_linear_forward.2} parent=0 // pred_check
    _
  $region11: #{fp8_linear_forward.2} parent=0 // pred_check_branch
    %288 = sbr.rel (0) target = $region13
  $region12: #{fp8_linear_forward.2} parent=0 // pred_region
    _
  $region13: #{fp8_linear_forward.2} parent=0 // pred_fallthru
    _
  // Predicated region
  $region14: #{fp8_linear_forward.2} parent=0 // pred_check
    _
  $region15: #{fp8_linear_forward.2} parent=0 // pred_check_branch
    %290 = sbr.rel (0) target = $region17
  $region16: #{fp8_linear_forward.2} parent=0 // pred_region
    _
  $region17: #{fp8_linear_forward.2} parent=0 // pred_fallthru
    _
  // Predicated region
  $region18: #{fp8_linear_forward.2} parent=0 // pred_check
    _
  $region19: #{fp8_linear_forward.2} parent=0 // pred_check_branch
    %292 = sbr.rel (0) target = $region21
  $region20: #{fp8_linear_forward.2} parent=0 // pred_region
    _
  $region21: #{fp8_linear_forward.2} parent=0 // pred_fallthru
    _

// kernel: fp8_linear_forward.3
$region0: #{fp8_linear_forward.3}
  #allocation0 [shape = 'u32[]', space=smem, size = 0x4, offset = 0x4, fixed_abs, tag = 'smem constant byte address 0x4 - core index']
  #allocation1 [shape = 'u32[72,128]{1,0:T(1,128)}', space=vmem, size = 0x9000, scoped, tag = 'internal scratch']
  #allocation2 [shape = 'f32[32,128]{1,0:T(8,128)}', space=vmem, size = 0x4000, scoped, tag = 'scratch operand']
  %s0 = inlined_call_operand.vmem [shape: f8e4m3fn[32,256], index: 0, kind: input, shape index: {}]
  %s1 = inlined_call_operand.vmem [shape: f32[32,2], index: 1, kind: input, shape index: {}]
  %s2 = inlined_call_operand.hbm [shape: f8e4m3fn[256,256], index: 2, kind: input, shape index: {}]
  %s3 = inlined_call_operand.vmem [shape: f32[1,256], index: 3, kind: input, shape index: {}]
  %s4 = inlined_call_operand.vmem [shape: f32[1,256], index: 4, kind: input, shape index: {}]
  %s5 = inlined_call_operand.vmem [shape: f32[32,256], index: 5, kind: output, shape index: {}]
  %s6 = sld [smem:[#allocation0]]
  $region139: #{fp8_linear_forward.3} parent=0
    _
  %s8 = ssub.s32 1, %s6
  %s9 = scalar_select 0, %s8, %s6
  $region1: #{fp8_linear_forward.3} parent=0
    #allocation3 [shape = 'u8[65536]{0}', space=vmem, size = 0x10000, scoped, tag = 'input window, operand 2']
    #allocation4 [shape = 's32[2]{0}', space=sflag, size = 0x8, scoped, tag = 'scoped memory for fp8_linear_forward.3']
    #allocation5 [shape = 'u8[32768]{0}', space=vmem, size = 0x8000, scoped, tag = 'output window, operand 0']
    %10 = vsyncpa [#allocation4], 0
    %s11 = scalar_lea.sflag [#allocation4], 1
    %12 = vsyncpa %s11, 0
    loop: start=0, step=1, limit=4
    $region2: #{fp8_linear_forward.3} parent=1 // loop_pre_header
      _
    $region3: #{fp8_linear_forward.3} parent=1 // loop_header
      %s14 = sphi 0, %s18
      %p15 = scmp.ge.s32.totalorder %s14, 4
      %s21 = sphi 0, %s40
      %s22 = sphi 0, %s36
      %s23 = sphi 0, %s32
      %s24 = sphi 0, %s21
      %s25 = sphi 0, %s22
      %s26 = sphi 0, %s23
      %s27 = sphi 0, %s24
      %s28 = sphi 0, %s25
      %s29 = sphi 0, %s26
      %s45 = sphi 0, %s47
      %s48 = sphi 0, %s45
      %s49 = sphi 0, %s48
      %s65 = sphi 0, %s49
      %s71 = sphi 0, %s73
      %s74 = sphi 0, %s71
      %s75 = sphi 0, %s74
      %s91 = sphi 0, %s75
      %s99 = sphi 0, %s101
      %s102 = sphi 0, %s99
      %s103 = sphi 0, %s102
      %s119 = sphi 0, %s103
      %s125 = sphi 0, %s127
      %s128 = sphi 0, %s125
      %s129 = sphi 0, %s128
      %s145 = sphi 0, %s129
      %s151 = sphi 0, %s153
      %s154 = sphi 0, %s151
      %s155 = sphi 0, %s154
      %s171 = sphi 0, %s155
      %s179 = sphi 0, %s181
      %s182 = sphi 0, %s179
      %s183 = sphi 0, %s182
      %s199 = sphi 0, %s183
    $region4: #{fp8_linear_forward.3} parent=1 // loop_header_branch
      %17 = sbr.rel (%p15) target = $region8
    $region5: #{fp8_linear_forward.3} parent=1 // loop_body
      %s19 = ssub.s32 %s14, 1
      %s20 = ssub.s32 %s14, 2
      %s30 = sadd.s32 1, %s23
      %p31 = scmp.ge.s32.totalorder %s30, 1
      %s32 = scalar_select %p31, 0, %s30
      %s33 = sadd.s32 1, %s22
      %s34 = scalar_select %p31, %s33, %s22
      %p35 = scmp.ge.s32.totalorder %s34, 2
      %s36 = scalar_select %p35, 0, %s34
      %s37 = sadd.s32 1, %s21
      %s38 = scalar_select %p35, %s37, %s21
      %p39 = scmp.ge.s32.totalorder %s38, 1
      %s40 = scalar_select %p39, 0, %s38
      %s41 = ssub.s32 %s21, %s40
      %s42 = ssub.s32 %s23, %s32
      %s43 = sor.u32 %s41, %s42
      %p44 = scmp.eq.s32.totalorder %s43, 0
      %s46 = sadd.s32 %s45, 1
      %s47 = scalar_select %p44, %s45, %s46
      %p50 = pneg %p44
      %p51 = scmp.eq.s32.totalorder %s14, 1
      %p52 = por %p50, %p51
      %p53 = scmp.ne.s32.totalorder %s45, %s48
      %p54 = scmp.eq.s32.totalorder %s14, 0
      %p55 = por %p53, %p54
      %p56 = scmp.ne.s32.totalorder %s45, %s48
      %p57 = scmp.eq.s32.totalorder %s19, 1
      %p58 = por %p56, %p57
      %p59 = scmp.ne.s32.totalorder %s48, %s49
      %p60 = scmp.eq.s32.totalorder %s19, 0
      %p61 = por %p59, %p60
      %p62 = scmp.ne.s32.totalorder %s48, %s49
      %p63 = scmp.eq.s32.totalorder %s20, 1
      %p64 = por %p62, %p63
      %p66 = scmp.ne.s32.totalorder %s49, %s65
      %p67 = scmp.eq.s32.totalorder %s20, 0
      %p68 = por %p66, %p67
      %s69 = ssub.s32 %s21, %s40
      %p70 = scmp.eq.s32.totalorder %s69, 0
      %s72 = sadd.s32 %s71, 1
      %s73 = scalar_select %p70, %s71, %s72
      %p76 = pneg %p70
      %p77 = scmp.eq.s32.totalorder %s14, 1
      %p78 = por %p76, %p77
      %p79 = scmp.ne.s32.totalorder %s71, %s74
      %p80 = scmp.eq.s32.totalorder %s14, 0
      %p81 = por %p79, %p80
      %p82 = scmp.ne.s32.totalorder %s71, %s74
      %p83 = scmp.eq.s32.totalorder %s19, 1
      %p84 = por %p82, %p83
      %p85 = scmp.ne.s32.totalorder %s74, %s75
      %p86 = scmp.eq.s32.totalorder %s19, 0
      %p87 = por %p85, %p86
      %p88 = scmp.ne.s32.totalorder %s74, %s75
      %p89 = scmp.eq.s32.totalorder %s20, 1
      %p90 = por %p88, %p89
      %p92 = scmp.ne.s32.totalorder %s75, %s91
      %p93 = scmp.eq.s32.totalorder %s20, 0
      %p94 = por %p92, %p93
      %s95 = ssub.s32 %s23, %s32
      %s96 = ssub.s32 %s22, %s36
      %s97 = sor.u32 %s95, %s96
      %p98 = scmp.eq.s32.totalorder %s97, 0
      %s100 = sadd.s32 %s99, 1
      %s101 = scalar_select %p98, %s99, %s100
      %p104 = pneg %p98
      %p105 = scmp.eq.s32.totalorder %s14, 1
      %p106 = por %p104, %p105
      %p107 = scmp.ne.s32.totalorder %s99, %s102
      %p108 = scmp.eq.s32.totalorder %s14, 0
      %p109 = por %p107, %p108
      %p110 = scmp.ne.s32.totalorder %s99, %s102
      %p111 = scmp.eq.s32.totalorder %s19, 1
      %p112 = por %p110, %p111
      %p113 = scmp.ne.s32.totalorder %s102, %s103
      %p114 = scmp.eq.s32.totalorder %s19, 0
      %p115 = por %p113, %p114
      %p116 = scmp.ne.s32.totalorder %s102, %s103
      %p117 = scmp.eq.s32.totalorder %s20, 1
      %p118 = por %p116, %p117
      %p120 = scmp.ne.s32.totalorder %s103, %s119
      %p121 = scmp.eq.s32.totalorder %s20, 0
      %p122 = por %p120, %p121
      %s123 = ssub.s32 %s22, %s36
      %p124 = scmp.eq.s32.totalorder %s123, 0
      %s126 = sadd.s32 %s125, 1
      %s127 = scalar_select %p124, %s125, %s126
      %p130 = pneg %p124
      %p131 = scmp.eq.s32.totalorder %s14, 1
      %p132 = por %p130, %p131
      %p133 = scmp.ne.s32.totalorder %s125, %s128
      %p134 = scmp.eq.s32.totalorder %s14, 0
      %p135 = por %p133, %p134
      %p136 = scmp.ne.s32.totalorder %s125, %s128
      %p137 = scmp.eq.s32.totalorder %s19, 1
      %p138 = por %p136, %p137
      %p139 = scmp.ne.s32.totalorder %s128, %s129
      %p140 = scmp.eq.s32.totalorder %s19, 0
      %p141 = por %p139, %p140
      %p142 = scmp.ne.s32.totalorder %s128, %s129
      %p143 = scmp.eq.s32.totalorder %s20, 1
      %p144 = por %p142, %p143
      %p146 = scmp.ne.s32.totalorder %s129, %s145
      %p147 = scmp.eq.s32.totalorder %s20, 0
      %p148 = por %p146, %p147
      %s149 = ssub.s32 %s22, %s36
      %p150 = scmp.eq.s32.totalorder %s149, 0
      %s152 = sadd.s32 %s151, 1
      %s153 = scalar_select %p150, %s151, %s152
      %p156 = pneg %p150
      %p157 = scmp.eq.s32.totalorder %s14, 1
      %p158 = por %p156, %p157
      %p159 = scmp.ne.s32.totalorder %s151, %s154
      %p160 = scmp.eq.s32.totalorder %s14, 0
      %p161 = por %p159, %p160
      %p162 = scmp.ne.s32.totalorder %s151, %s154
      %p163 = scmp.eq.s32.totalorder %s19, 1
      %p164 = por %p162, %p163
      %p165 = scmp.ne.s32.totalorder %s154, %s155
      %p166 = scmp.eq.s32.totalorder %s19, 0
      %p167 = por %p165, %p166
      %p168 = scmp.ne.s32.totalorder %s154, %s155
      %p169 = scmp.eq.s32.totalorder %s20, 1
      %p170 = por %p168, %p169
      %p172 = scmp.ne.s32.totalorder %s155, %s171
      %p173 = scmp.eq.s32.totalorder %s20, 0
      %p174 = por %p172, %p173
      %s175 = ssub.s32 %s21, %s40
      %s176 = ssub.s32 %s22, %s36
      %s177 = sor.u32 %s175, %s176
      %p178 = scmp.eq.s32.totalorder %s177, 0
      %s180 = sadd.s32 %s179, 1
      %s181 = scalar_select %p178, %s179, %s180
      %p184 = pneg %p178
      %p185 = scmp.eq.s32.totalorder %s14, 1
      %p186 = por %p184, %p185
      %p187 = scmp.ne.s32.totalorder %s179, %s182
      %p188 = scmp.eq.s32.totalorder %s14, 0
      %p189 = por %p187, %p188
      %p190 = scmp.ne.s32.totalorder %s179, %s182
      %p191 = scmp.eq.s32.totalorder %s19, 1
      %p192 = por %p190, %p191
      %p193 = scmp.ne.s32.totalorder %s182, %s183
      %p194 = scmp.eq.s32.totalorder %s19, 0
      %p195 = por %p193, %p194
      %p196 = scmp.ne.s32.totalorder %s182, %s183
      %p197 = scmp.eq.s32.totalorder %s20, 1
      %p198 = por %p196, %p197
      %p200 = scmp.ne.s32.totalorder %s183, %s199
      %p201 = scmp.eq.s32.totalorder %s20, 0
      %p202 = por %p200, %p201
      %p203 = scmp.le.s32.totalorder 1, %s14
      %p204 = scmp.lt.s32.totalorder %s14, 3
      %p205 = pnand %p203, %p204
      %p206 = pneg %p205
      // Predicated region
      $region9: #{fp8_linear_forward.3} parent=5 // pred_check
        _
      $region10: #{fp8_linear_forward.3} parent=5 // pred_check_branch
        %208 = sbr.rel (%p205) target = $region12
      $region11: #{fp8_linear_forward.3} parent=5 // pred_region
        %s209 = ssub.s32 %s14, 1
        // Predicated region
        $region13: #{fp8_linear_forward.3} parent=11 // pred_check
          %p210 = pneg %p61
        $region14: #{fp8_linear_forward.3} parent=11 // pred_check_branch
          %212 = sbr.rel (%p210) target = $region16
        $region15: #{fp8_linear_forward.3} parent=11 // pred_region
          %s213 = smul.u32 2, %s26
          %p214 = scmp.lt.s32.totalorder %s24, 0
          %s215 = scalar_select %p214, %s24, 0
          %p216 = scmp.lt.s32.totalorder %s213, 1
          %s217 = scalar_select %p216, %s213, 1
          %s218 = smul.addr %s215, 2
          %s219 = sadd.s32 %s217, %s218
          %s220 = smul.addr %s219, 8
          %s221 = scalar_lea.vmem %s0, %s220
          %s222 = smul.u32 2, %s26
        $region16: #{fp8_linear_forward.3} parent=11 // pred_fallthru
          _
        // Predicated region
        $region17: #{fp8_linear_forward.3} parent=11 // pred_check
          %p223 = pneg %p87
        $region18: #{fp8_linear_forward.3} parent=11 // pred_check_branch
          %225 = sbr.rel (%p223) target = $region20
        $region19: #{fp8_linear_forward.3} parent=11 // pred_region
          %s226 = smul.u32 4, %s24
          %p227 = scmp.lt.s32.totalorder %s226, 3
          %s228 = scalar_select %p227, %s226, 3
          %s229 = smul.addr %s228, 8
          %s230 = scalar_lea.vmem %s1, %s229
          %s231 = smul.u32 4, %s24
        $region20: #{fp8_linear_forward.3} parent=11 // pred_fallthru
          _
      $region12: #{fp8_linear_forward.3} parent=5 // pred_fallthru
        _
      %p232 = scmp.lt.s32.totalorder %s14, 2
      // Predicated region
      $region21: #{fp8_linear_forward.3} parent=5 // pred_check
        %p233 = pneg %p232
      $region22: #{fp8_linear_forward.3} parent=5 // pred_check_branch
        %235 = sbr.rel (%p233) target = $region24
      $region23: #{fp8_linear_forward.3} parent=5 // pred_region
        // Predicated region
        $region25: #{fp8_linear_forward.3} parent=23 // pred_check
          %p236 = pneg %p109
        $region26: #{fp8_linear_forward.3} parent=23 // pred_check_branch
          %238 = sbr.rel (%p236) target = $region28
        $region27: #{fp8_linear_forward.3} parent=23 // pred_region
          %s239 = sand.u32 %s99, 1
          %s240 = scalar_lea.sflag [#allocation4], %s239
          %s241 = sand.u32 %s99, 1
          %s242 = smul.addr %s241, 64
          %s243 = scalar_lea.vmem [#allocation3], %s242
          %s244 = smul.u32 8, %s23
          %246 = vsyncadd %s240, 0
          %s247 = smul.addr %s244, 2
          %s248 = sadd.s32 %s22, %s247
          %s249 = smul.addr %s248, 8
          %s250 = scalar_lea.hbm %s2, %s249
          %s251 = sshll.u32 %s250, 4
          %s252 = int_to_ptr.hbm [resolvable:$true] %s251
          %s253 = sshll.u32 %s243, 4
          %s254 = int_to_ptr.vmem [resolvable:$true] %s253
          %259 = dma.hbm_to_vmem [thread:$0]  %s252, 1024, %s254, %s240, 256, 128, 8
        $region28: #{fp8_linear_forward.3} parent=23 // pred_fallthru
          _
        // Predicated region
        $region29: #{fp8_linear_forward.3} parent=23 // pred_check
          %p260 = pneg %p135
        $region30: #{fp8_linear_forward.3} parent=23 // pred_check_branch
          %262 = sbr.rel (%p260) target = $region32
        $region31: #{fp8_linear_forward.3} parent=23 // pred_region
          %p263 = scmp.lt.s32.totalorder %s22, 1
          %s264 = scalar_select %p263, %s22, 1
          %s265 = scalar_lea.vmem %s3, %s264
        $region32: #{fp8_linear_forward.3} parent=23 // pred_fallthru
          _
        // Predicated region
        $region33: #{fp8_linear_forward.3} parent=23 // pred_check
          %p266 = pneg %p161
        $region34: #{fp8_linear_forward.3} parent=23 // pred_check_branch
          %268 = sbr.rel (%p266) target = $region36
        $region35: #{fp8_linear_forward.3} parent=23 // pred_region
          %p269 = scmp.lt.s32.totalorder %s22, 1
          %s270 = scalar_select %p269, %s22, 1
          %s271 = scalar_lea.vmem %s4, %s270
        $region36: #{fp8_linear_forward.3} parent=23 // pred_fallthru
          _
      $region24: #{fp8_linear_forward.3} parent=5 // pred_fallthru
        _
      %p272 = scmp.le.s32.totalorder 1, %s14
      %p273 = scmp.lt.s32.totalorder %s14, 3
      %p274 = pnand %p272, %p273
      %p275 = pneg %p274
      // Predicated region
      $region37: #{fp8_linear_forward.3} parent=5 // pred_check
        _
      $region38: #{fp8_linear_forward.3} parent=5 // pred_check_branch
        %277 = sbr.rel (%p274) target = $region40
      $region39: #{fp8_linear_forward.3} parent=5 // pred_region
        %s278 = ssub.s32 %s14, 1
        %s279 = sand.u32 %s102, 1
        %s280 = scalar_lea.sflag [#allocation4], %s279
        %s281 = sand.u32 %s102, 1
        %s282 = smul.addr %s281, 64
        %s283 = scalar_lea.vmem [#allocation3], %s282
        // Predicated region
        $region41: #{fp8_linear_forward.3} parent=39 // pred_check
          %p284 = pneg %p115
        $region42: #{fp8_linear_forward.3} parent=39 // pred_check_branch
          %286 = sbr.rel (%p284) target = $region44
        $region43: #{fp8_linear_forward.3} parent=39 // pred_region
          %288 = dma.done %s280, 1024
        $region44: #{fp8_linear_forward.3} parent=39 // pred_fallthru
          _
        %s289 = smul.u32 2, %s26
        %p290 = scmp.lt.s32.totalorder %s24, 0
        %s291 = scalar_select %p290, %s24, 0
        %p292 = scmp.lt.s32.totalorder %s289, 1
        %s293 = scalar_select %p292, %s289, 1
        %s294 = smul.addr %s291, 2
        %s295 = sadd.s32 %s293, %s294
        %s296 = smul.addr %s295, 8
        %s297 = scalar_lea.vmem %s0, %s296
        %p298 = pneg %p61
        %p299 = pneg %p58
        %s300 = smul.u32 4, %s24
        %p301 = scmp.lt.s32.totalorder %s300, 3
        %s302 = scalar_select %p301, %s300, 3
        %s303 = smul.addr %s302, 8
        %s304 = scalar_lea.vmem %s1, %s303
        %p305 = pneg %p87
        %p306 = pneg %p84
        %s307 = sand.u32 %s102, 1
        %s308 = scalar_lea.sflag [#allocation4], %s307
        %s309 = sand.u32 %s102, 1
        %s310 = smul.addr %s309, 64
        %s311 = scalar_lea.vmem [#allocation3], %s310
        %p312 = pneg %p115
        %p313 = pneg %p112
        %p314 = scmp.lt.s32.totalorder %s25, 1
        %s315 = scalar_select %p314, %s25, 1
        %s316 = scalar_lea.vmem %s3, %s315
        %p317 = pneg %p141
        %p318 = pneg %p138
        %p319 = scmp.lt.s32.totalorder %s25, 1
        %s320 = scalar_select %p319, %s25, 1
        %s321 = scalar_lea.vmem %s4, %s320
        %p322 = pneg %p167
        %p323 = pneg %p164
        %p324 = pneg %p195
        %p325 = pneg %p192
        %s326 = sand.u32 %s182, 1
        %s327 = sand.u32 %s182, 1
        %s328 = smul.addr %s327, 32
        %s329 = scalar_lea.vmem [#allocation5], %s328
        %s330 = smul.u32 2, %s26
        %p331 = scmp.lt.s32.totalorder %s24, 0
        %s332 = scalar_select %p331, %s24, 0
        %p333 = scmp.lt.s32.totalorder %s330, 1
        %s334 = scalar_select %p333, %s330, 1
        %s335 = smul.addr %s332, 2
        %s336 = sadd.s32 %s334, %s335
        %s337 = smul.addr %s336, 8
        %s338 = scalar_lea.vmem %s0, %s337
        %s339 = smul.u32 2, %s26
        %s340 = smul.u32 4, %s24
        %p341 = scmp.lt.s32.totalorder %s340, 3
        %s342 = scalar_select %p341, %s340, 3
        %s343 = smul.addr %s342, 8
        %s344 = scalar_lea.vmem %s1, %s343
        %s345 = smul.u32 4, %s24
        %s346 = smul.u32 8, %s26
        %p347 = scmp.lt.s32.totalorder %s25, 1
        %s348 = scalar_select %p347, %s25, 1
        %s349 = scalar_lea.vmem %s3, %s348
        %p350 = scmp.lt.s32.totalorder %s25, 1
        %s351 = scalar_select %p350, %s25, 1
        %s352 = scalar_lea.vmem %s4, %s351
        %s353 = smul.u32 4, %s24
        %p354 = scmp.eq.s32.totalorder %s26, 0
        // Predicated region
        $region45: #{fp8_linear_forward.3} parent=39 // pred_check
          %p355 = pneg %p354
        $region46: #{fp8_linear_forward.3} parent=39 // pred_check_branch
          %357 = sbr.rel (%p355) target = $region48
        $region47: #{fp8_linear_forward.3} parent=39 // pred_region
          %358 = vst [vmem:[#allocation2] sm:$0xff] 0.0
          %359 = vst [vmem:[#allocation2 + $0x8] sm:$0xff] 0.0
          %360 = vst [vmem:[#allocation2 + $0x10] sm:$0xff] 0.0
          %361 = vst [vmem:[#allocation2 + $0x18] sm:$0xff] 0.0
        $region48: #{fp8_linear_forward.3} parent=39 // pred_fallthru
          _
        %v362 = vld [vmem:[%s344] sm:$0xff]
        %v363 = vld [vmem:[%s344 + $0x8] sm:$0xff]
        %v364 = vld [vmem:[%s344 + $0x10] sm:$0xff]
        %v365 = vld [vmem:[%s344 + $0x18] sm:$0xff]
        %v366 = vld [vmem:[%s338] sm:$0xff]
        $region49: #{fp8_linear_forward.3} parent=39
          #allocation6 [shape = 'u8[4096]{0}', space=vmem, size = 0x1000, scoped, tag = 'scoped memory for fp8_linear_forward.3']
          %367 = vst [vmem:[#allocation6] sm:$0xff] %v366
          %v368 = vld [vmem:[#allocation6] sm:$0x3]
          %v369 = vunpack.c.0.f8e4m3b11 %v368
          %v370 = vunpack.c.1.f8e4m3b11 %v368
          %v371 = vunpack.c.2.f8e4m3b11 %v368
          %v372 = vunpack.c.3.f8e4m3b11 %v368
          %v373 = vand.u32 2147483647, %v369
          %vm374 = vcmp.gt.f32.partialorder %v373, 29.0
          %vm375 = vcmp.ne.f32.partialorder %v369, %v369
          %v376 = vmul.f32 %v369, 16.0
          %v377 = vsel %vm375, -0.0, %v376
          %v378 = vsel %vm374, nan, %v377
          %v379 = vand.u32 2147483647, %v370
          %vm380 = vcmp.gt.f32.partialorder %v379, 29.0
          %vm381 = vcmp.ne.f32.partialorder %v370, %v370
          %v382 = vmul.f32 %v370, 16.0
          %v383 = vsel %vm381, -0.0, %v382
          %v384 = vsel %vm380, nan, %v383
          %v385 = vand.u32 2147483647, %v371
          %vm386 = vcmp.gt.f32.partialorder %v385, 29.0
          %vm387 = vcmp.ne.f32.partialorder %v371, %v371
          %v388 = vmul.f32 %v371, 16.0
          %v389 = vsel %vm387, -0.0, %v388
          %v390 = vsel %vm386, nan, %v389
          %v391 = vand.u32 2147483647, %v372
          %vm392 = vcmp.gt.f32.partialorder %v391, 29.0
          %vm393 = vcmp.ne.f32.partialorder %v372, %v372
          %v394 = vmul.f32 %v372, 16.0
          %v395 = vsel %vm393, -0.0, %v394
          %v396 = vsel %vm392, nan, %v395
        $region50: #{fp8_linear_forward.3} parent=39
          #allocation7 [shape = 'u8[4096]{0}', space=vmem, size = 0x1000, scoped, tag = 'scoped memory for fp8_linear_forward.3']
          %397 = vst [vmem:[#allocation7] sm:$0xff] %v366
          %s398 = scalar_lea.vmem [#allocation7], 2
          %v399 = vld [vmem:[%s398] sm:$0x3]
          %v400 = vunpack.c.0.f8e4m3b11 %v399
          %v401 = vunpack.c.1.f8e4m3b11 %v399
          %v402 = vunpack.c.2.f8e4m3b11 %v399
          %v403 = vunpack.c.3.f8e4m3b11 %v399
          %v404 = vand.u32 2147483647, %v400
          %vm405 = vcmp.gt.f32.partialorder %v404, 29.0
          %vm406 = vcmp.ne.f32.partialorder %v400, %v400
          %v407 = vmul.f32 %v400, 16.0
          %v408 = vsel %vm406, -0.0, %v407
          %v409 = vsel %vm405, nan, %v408
          %v410 = vand.u32 2147483647, %v401
          %vm411 = vcmp.gt.f32.partialorder %v410, 29.0
          %vm412 = vcmp.ne.f32.partialorder %v401, %v401
          %v413 = vmul.f32 %v401, 16.0
          %v414 = vsel %vm412, -0.0, %v413
          %v415 = vsel %vm411, nan, %v414
          %v416 = vand.u32 2147483647, %v402
          %vm417 = vcmp.gt.f32.partialorder %v416, 29.0
          %vm418 = vcmp.ne.f32.partialorder %v402, %v402
          %v419 = vmul.f32 %v402, 16.0
          %v420 = vsel %vm418, -0.0, %v419
          %v421 = vsel %vm417, nan, %v420
          %v422 = vand.u32 2147483647, %v403
          %vm423 = vcmp.gt.f32.partialorder %v422, 29.0
          %vm424 = vcmp.ne.f32.partialorder %v403, %v403
          %v425 = vmul.f32 %v403, 16.0
          %v426 = vsel %vm424, -0.0, %v425
          %v427 = vsel %vm423, nan, %v426
        $region51: #{fp8_linear_forward.3} parent=39
          #allocation8 [shape = 'u8[4096]{0}', space=vmem, size = 0x1000, scoped, tag = 'scoped memory for fp8_linear_forward.3']
          %428 = vst [vmem:[#allocation8] sm:$0xff] %v366
          %s429 = scalar_lea.vmem [#allocation8], 4
          %v430 = vld [vmem:[%s429] sm:$0x3]
          %v431 = vunpack.c.0.f8e4m3b11 %v430
          %v432 = vunpack.c.1.f8e4m3b11 %v430
          %v433 = vunpack.c.2.f8e4m3b11 %v430
          %v434 = vunpack.c.3.f8e4m3b11 %v430
          %v435 = vand.u32 2147483647, %v431
          %vm436 = vcmp.gt.f32.partialorder %v435, 29.0
          %vm437 = vcmp.ne.f32.partialorder %v431, %v431
          %v438 = vmul.f32 %v431, 16.0
          %v439 = vsel %vm437, -0.0, %v438
          %v440 = vsel %vm436, nan, %v439
          %v441 = vand.u32 2147483647, %v432
          %vm442 = vcmp.gt.f32.partialorder %v441, 29.0
          %vm443 = vcmp.ne.f32.partialorder %v432, %v432
          %v444 = vmul.f32 %v432, 16.0
          %v445 = vsel %vm443, -0.0, %v444
          %v446 = vsel %vm442, nan, %v445
          %v447 = vand.u32 2147483647, %v433
          %vm448 = vcmp.gt.f32.partialorder %v447, 29.0
          %vm449 = vcmp.ne.f32.partialorder %v433, %v433
          %v450 = vmul.f32 %v433, 16.0
          %v451 = vsel %vm449, -0.0, %v450
          %v452 = vsel %vm448, nan, %v451
          %v453 = vand.u32 2147483647, %v434
          %vm454 = vcmp.gt.f32.partialorder %v453, 29.0
          %vm455 = vcmp.ne.f32.partialorder %v434, %v434
          %v456 = vmul.f32 %v434, 16.0
          %v457 = vsel %vm455, -0.0, %v456
          %v458 = vsel %vm454, nan, %v457
        $region52: #{fp8_linear_forward.3} parent=39
          #allocation9 [shape = 'u8[4096]{0}', space=vmem, size = 0x1000, scoped, tag = 'scoped memory for fp8_linear_forward.3']
          %459 = vst [vmem:[#allocation9] sm:$0xff] %v366
          %s460 = scalar_lea.vmem [#allocation9], 6
          %v461 = vld [vmem:[%s460] sm:$0x3]
          %v462 = vunpack.c.0.f8e4m3b11 %v461
          %v463 = vunpack.c.1.f8e4m3b11 %v461
          %v464 = vunpack.c.2.f8e4m3b11 %v461
          %v465 = vunpack.c.3.f8e4m3b11 %v461
          %v466 = vand.u32 2147483647, %v462
          %vm467 = vcmp.gt.f32.partialorder %v466, 29.0
          %vm468 = vcmp.ne.f32.partialorder %v462, %v462
          %v469 = vmul.f32 %v462, 16.0
          %v470 = vsel %vm468, -0.0, %v469
          %v471 = vsel %vm467, nan, %v470
          %v472 = vand.u32 2147483647, %v463
          %vm473 = vcmp.gt.f32.partialorder %v472, 29.0
          %vm474 = vcmp.ne.f32.partialorder %v463, %v463
          %v475 = vmul.f32 %v463, 16.0
          %v476 = vsel %vm474, -0.0, %v475
          %v477 = vsel %vm473, nan, %v476
          %v478 = vand.u32 2147483647, %v464
          %vm479 = vcmp.gt.f32.partialorder %v478, 29.0
          %vm480 = vcmp.ne.f32.partialorder %v464, %v464
          %v481 = vmul.f32 %v464, 16.0
          %v482 = vsel %vm480, -0.0, %v481
          %v483 = vsel %vm479, nan, %v482
          %v484 = vand.u32 2147483647, %v465
          %vm485 = vcmp.gt.f32.partialorder %v484, 29.0
          %vm486 = vcmp.ne.f32.partialorder %v465, %v465
          %v487 = vmul.f32 %v465, 16.0
          %v488 = vsel %vm486, -0.0, %v487
          %v489 = vsel %vm485, nan, %v488
        %v490 = vpack.c.bf16 %v378, %v378
        %v491 = vpack.c.bf16 %v409, %v409
        %v492 = vpack.c.bf16 %v440, %v440
        %v493 = vpack.c.bf16 %v471, %v471
        %v494 = vunpack.c.l.bf16 %v490
        %v495 = vunpack.c.l.bf16 %v491
        %v496 = vunpack.c.l.bf16 %v492
        %v497 = vunpack.c.l.bf16 %v493
        %499 = vset.pattern.permute.xlu0 0
        %500 = vperm.xlu0 %499, %v362
        %v501 = vpop.permute.xlu0 %500
        %504 = vset.pattern.permute.xlu0 0
        %505 = vperm.xlu0 %504, %v363
        %v506 = vpop.permute.xlu0 %505
        %509 = vset.pattern.permute.xlu0 0
        %510 = vperm.xlu0 %509, %v364
        %v511 = vpop.permute.xlu0 %510
        %514 = vset.pattern.permute.xlu0 0
        %515 = vperm.xlu0 %514, %v365
        %v516 = vpop.permute.xlu0 %515
        %v518 = vmul.f32 %v494, %v501
        %v519 = vmul.f32 %v495, %v506
        %v520 = vmul.f32 %v496, %v511
        %v521 = vmul.f32 %v497, %v516
        %v522 = vpack.c.bf16 %v518, %v518
        %v523 = vpack.c.bf16 %v519, %v519
        %v524 = vpack.c.bf16 %v520, %v520
        %v525 = vpack.c.bf16 %v521, %v521
        %v526 = vld [vmem:[%s338 + $0x8] sm:$0xff]
        $region53: #{fp8_linear_forward.3} parent=39
          #allocation10 [shape = 'u8[4096]{0}', space=vmem, size = 0x1000, scoped, tag = 'scoped memory for fp8_linear_forward.3']
          %527 = vst [vmem:[#allocation10] sm:$0xff] %v526
          %v528 = vld [vmem:[#allocation10] sm:$0x3]
          %v529 = vunpack.c.0.f8e4m3b11 %v528
          %v530 = vunpack.c.1.f8e4m3b11 %v528
          %v531 = vunpack.c.2.f8e4m3b11 %v528
          %v532 = vunpack.c.3.f8e4m3b11 %v528
          %v533 = vand.u32 2147483647, %v529
          %vm534 = vcmp.gt.f32.partialorder %v533, 29.0
          %vm535 = vcmp.ne.f32.partialorder %v529, %v529
          %v536 = vmul.f32 %v529, 16.0
          %v537 = vsel %vm535, -0.0, %v536
          %v538 = vsel %vm534, nan, %v537
          %v539 = vand.u32 2147483647, %v530
          %vm540 = vcmp.gt.f32.partialorder %v539, 29.0
          %vm541 = vcmp.ne.f32.partialorder %v530, %v530
          %v542 = vmul.f32 %v530, 16.0
          %v543 = vsel %vm541, -0.0, %v542
          %v544 = vsel %vm540, nan, %v543
          %v545 = vand.u32 2147483647, %v531
          %vm546 = vcmp.gt.f32.partialorder %v545, 29.0
          %vm547 = vcmp.ne.f32.partialorder %v531, %v531
          %v548 = vmul.f32 %v531, 16.0
          %v549 = vsel %vm547, -0.0, %v548
          %v550 = vsel %vm546, nan, %v549
          %v551 = vand.u32 2147483647, %v532
          %vm552 = vcmp.gt.f32.partialorder %v551, 29.0
          %vm553 = vcmp.ne.f32.partialorder %v532, %v532
          %v554 = vmul.f32 %v532, 16.0
          %v555 = vsel %vm553, -0.0, %v554
          %v556 = vsel %vm552, nan, %v555
        $region54: #{fp8_linear_forward.3} parent=39
          #allocation11 [shape = 'u8[4096]{0}', space=vmem, size = 0x1000, scoped, tag = 'scoped memory for fp8_linear_forward.3']
          %557 = vst [vmem:[#allocation11] sm:$0xff] %v526
          %s558 = scalar_lea.vmem [#allocation11], 2
          %v559 = vld [vmem:[%s558] sm:$0x3]
          %v560 = vunpack.c.0.f8e4m3b11 %v559
          %v561 = vunpack.c.1.f8e4m3b11 %v559
          %v562 = vunpack.c.2.f8e4m3b11 %v559
          %v563 = vunpack.c.3.f8e4m3b11 %v559
          %v564 = vand.u32 2147483647, %v560
          %vm565 = vcmp.gt.f32.partialorder %v564, 29.0
          %vm566 = vcmp.ne.f32.partialorder %v560, %v560
          %v567 = vmul.f32 %v560, 16.0
          %v568 = vsel %vm566, -0.0, %v567
          %v569 = vsel %vm565, nan, %v568
          %v570 = vand.u32 2147483647, %v561
          %vm571 = vcmp.gt.f32.partialorder %v570, 29.0
          %vm572 = vcmp.ne.f32.partialorder %v561, %v561
          %v573 = vmul.f32 %v561, 16.0
          %v574 = vsel %vm572, -0.0, %v573
          %v575 = vsel %vm571, nan, %v574
          %v576 = vand.u32 2147483647, %v562
          %vm577 = vcmp.gt.f32.partialorder %v576, 29.0
          %vm578 = vcmp.ne.f32.partialorder %v562, %v562
          %v579 = vmul.f32 %v562, 16.0
          %v580 = vsel %vm578, -0.0, %v579
          %v581 = vsel %vm577, nan, %v580
          %v582 = vand.u32 2147483647, %v563
          %vm583 = vcmp.gt.f32.partialorder %v582, 29.0
          %vm584 = vcmp.ne.f32.partialorder %v563, %v563
          %v585 = vmul.f32 %v563, 16.0
          %v586 = vsel %vm584, -0.0, %v585
          %v587 = vsel %vm583, nan, %v586
        $region55: #{fp8_linear_forward.3} parent=39
          #allocation12 [shape = 'u8[4096]{0}', space=vmem, size = 0x1000, scoped, tag = 'scoped memory for fp8_linear_forward.3']
          %588 = vst [vmem:[#allocation12] sm:$0xff] %v526
          %s589 = scalar_lea.vmem [#allocation12], 4
          %v590 = vld [vmem:[%s589] sm:$0x3]
          %v591 = vunpack.c.0.f8e4m3b11 %v590
          %v592 = vunpack.c.1.f8e4m3b11 %v590
          %v593 = vunpack.c.2.f8e4m3b11 %v590
          %v594 = vunpack.c.3.f8e4m3b11 %v590
          %v595 = vand.u32 2147483647, %v591
          %vm596 = vcmp.gt.f32.partialorder %v595, 29.0
          %vm597 = vcmp.ne.f32.partialorder %v591, %v591
          %v598 = vmul.f32 %v591, 16.0
          %v599 = vsel %vm597, -0.0, %v598
          %v600 = vsel %vm596, nan, %v599
          %v601 = vand.u32 2147483647, %v592
          %vm602 = vcmp.gt.f32.partialorder %v601, 29.0
          %vm603 = vcmp.ne.f32.partialorder %v592, %v592
          %v604 = vmul.f32 %v592, 16.0
          %v605 = vsel %vm603, -0.0, %v604
          %v606 = vsel %vm602, nan, %v605
          %v607 = vand.u32 2147483647, %v593
          %vm608 = vcmp.gt.f32.partialorder %v607, 29.0
          %vm609 = vcmp.ne.f32.partialorder %v593, %v593
          %v610 = vmul.f32 %v593, 16.0
          %v611 = vsel %vm609, -0.0, %v610
          %v612 = vsel %vm608, nan, %v611
          %v613 = vand.u32 2147483647, %v594
          %vm614 = vcmp.gt.f32.partialorder %v613, 29.0
          %vm615 = vcmp.ne.f32.partialorder %v594, %v594
          %v616 = vmul.f32 %v594, 16.0
          %v617 = vsel %vm615, -0.0, %v616
          %v618 = vsel %vm614, nan, %v617
        $region56: #{fp8_linear_forward.3} parent=39
          #allocation13 [shape = 'u8[4096]{0}', space=vmem, size = 0x1000, scoped, tag = 'scoped memory for fp8_linear_forward.3']
          %619 = vst [vmem:[#allocation13] sm:$0xff] %v526
          %s620 = scalar_lea.vmem [#allocation13], 6
          %v621 = vld [vmem:[%s620] sm:$0x3]
          %v622 = vunpack.c.0.f8e4m3b11 %v621
          %v623 = vunpack.c.1.f8e4m3b11 %v621
          %v624 = vunpack.c.2.f8e4m3b11 %v621
          %v625 = vunpack.c.3.f8e4m3b11 %v621
          %v626 = vand.u32 2147483647, %v622
          %vm627 = vcmp.gt.f32.partialorder %v626, 29.0
          %vm628 = vcmp.ne.f32.partialorder %v622, %v622
          %v629 = vmul.f32 %v622, 16.0
          %v630 = vsel %vm628, -0.0, %v629
          %v631 = vsel %vm627, nan, %v630
          %v632 = vand.u32 2147483647, %v623
          %vm633 = vcmp.gt.f32.partialorder %v632, 29.0
          %vm634 = vcmp.ne.f32.partialorder %v623, %v623
          %v635 = vmul.f32 %v623, 16.0
          %v636 = vsel %vm634, -0.0, %v635
          %v637 = vsel %vm633, nan, %v636
          %v638 = vand.u32 2147483647, %v624
          %vm639 = vcmp.gt.f32.partialorder %v638, 29.0
          %vm640 = vcmp.ne.f32.partialorder %v624, %v624
          %v641 = vmul.f32 %v624, 16.0
          %v642 = vsel %vm640, -0.0, %v641
          %v643 = vsel %vm639, nan, %v642
          %v644 = vand.u32 2147483647, %v625
          %vm645 = vcmp.gt.f32.partialorder %v644, 29.0
          %vm646 = vcmp.ne.f32.partialorder %v625, %v625
          %v647 = vmul.f32 %v625, 16.0
          %v648 = vsel %vm646, -0.0, %v647
          %v649 = vsel %vm645, nan, %v648
        %v650 = vpack.c.bf16 %v538, %v538
        %v651 = vpack.c.bf16 %v569, %v569
        %v652 = vpack.c.bf16 %v600, %v600
        %v653 = vpack.c.bf16 %v631, %v631
        %v654 = vunpack.c.l.bf16 %v650
        %v655 = vunpack.c.l.bf16 %v651
        %v656 = vunpack.c.l.bf16 %v652
        %v657 = vunpack.c.l.bf16 %v653
        %658 = vset.pattern.permute.xlu0 1
        %659 = vperm.xlu0 %658, %v362
        %v660 = vpop.permute.xlu0 %659
        %662 = vset.pattern.permute.xlu0 1
        %663 = vperm.xlu0 %662, %v363
        %v664 = vpop.permute.xlu0 %663
        %666 = vset.pattern.permute.xlu0 1
        %667 = vperm.xlu0 %666, %v364
        %v668 = vpop.permute.xlu0 %667
        %670 = vset.pattern.permute.xlu0 1
        %671 = vperm.xlu0 %670, %v365
        %v672 = vpop.permute.xlu0 %671
        %v674 = vmul.f32 %v654, %v660
        %v675 = vmul.f32 %v655, %v664
        %v676 = vmul.f32 %v656, %v668
        %v677 = vmul.f32 %v657, %v672
        %v678 = vpack.c.bf16 %v674, %v674
        %v679 = vpack.c.bf16 %v675, %v675
        %v680 = vpack.c.bf16 %v676, %v676
        %v681 = vpack.c.bf16 %v677, %v677
        %v686 = vunpack.c.l.b16 %v522
        %v687 = vunpack.c.l.b16 %v523
        %v688 = vunpack.c.l.b16 %v524
        %v689 = vunpack.c.l.b16 %v525
        %v690 = vpack.c.b16 %v687, %v686
        %v691 = vpack.c.b16 %v689, %v688
        %v698 = vunpack.c.l.b16 %v678
        %v699 = vunpack.c.l.b16 %v679
        %v700 = vunpack.c.l.b16 %v680
        %v701 = vunpack.c.l.b16 %v681
        %v702 = vpack.c.b16 %v699, %v698
        %v703 = vpack.c.b16 %v701, %v700
        %v706 = vld [vmem:[%s283] sm:$0xff]
        %v707 = vld [vmem:[%s283 + $0x8] sm:$0xff]
        %v708 = vld [vmem:[%s283 + $0x10] sm:$0xff]
        %v709 = vld [vmem:[%s283 + $0x18] sm:$0xff]
        %v710 = vld [vmem:[%s283 + $0x20] sm:$0xff]
        %v711 = vld [vmem:[%s283 + $0x28] sm:$0xff]
        %v712 = vld [vmem:[%s283 + $0x30] sm:$0xff]
        %v713 = vld [vmem:[%s283 + $0x38] sm:$0xff]
        $region57: #{fp8_linear_forward.3} parent=39
          #allocation14 [shape = 'u8[4096]{0}', space=vmem, size = 0x1000, scoped, tag = 'scoped memory for fp8_linear_forward.3']
          %714 = vst [vmem:[#allocation14] sm:$0xff] %v706
          %v715 = vld [vmem:[#allocation14] sm:$0x3]
          %v716 = vunpack.c.0.f8e4m3b11 %v715
          %v717 = vunpack.c.1.f8e4m3b11 %v715
          %v718 = vunpack.c.2.f8e4m3b11 %v715
          %v719 = vunpack.c.3.f8e4m3b11 %v715
          %v720 = vand.u32 2147483647, %v716
          %vm721 = vcmp.gt.f32.partialorder %v720, 29.0
          %vm722 = vcmp.ne.f32.partialorder %v716, %v716
          %v723 = vmul.f32 %v716, 16.0
          %v724 = vsel %vm722, -0.0, %v723
          %v725 = vsel %vm721, nan, %v724
          %v726 = vand.u32 2147483647, %v717
          %vm727 = vcmp.gt.f32.partialorder %v726, 29.0
          %vm728 = vcmp.ne.f32.partialorder %v717, %v717
          %v729 = vmul.f32 %v717, 16.0
          %v730 = vsel %vm728, -0.0, %v729
          %v731 = vsel %vm727, nan, %v730
          %v732 = vand.u32 2147483647, %v718
          %vm733 = vcmp.gt.f32.partialorder %v732, 29.0
          %vm734 = vcmp.ne.f32.partialorder %v718, %v718
          %v735 = vmul.f32 %v718, 16.0
          %v736 = vsel %vm734, -0.0, %v735
          %v737 = vsel %vm733, nan, %v736
          %v738 = vand.u32 2147483647, %v719
          %vm739 = vcmp.gt.f32.partialorder %v738, 29.0
          %vm740 = vcmp.ne.f32.partialorder %v719, %v719
          %v741 = vmul.f32 %v719, 16.0
          %v742 = vsel %vm740, -0.0, %v741
          %v743 = vsel %vm739, nan, %v742
        $region58: #{fp8_linear_forward.3} parent=39
          #allocation15 [shape = 'u8[4096]{0}', space=vmem, size = 0x1000, scoped, tag = 'scoped memory for fp8_linear_forward.3']
          %744 = vst [vmem:[#allocation15] sm:$0xff] %v706
          %s745 = scalar_lea.vmem [#allocation15], 2
          %v746 = vld [vmem:[%s745] sm:$0x3]
          %v747 = vunpack.c.0.f8e4m3b11 %v746
          %v748 = vunpack.c.1.f8e4m3b11 %v746
          %v749 = vunpack.c.2.f8e4m3b11 %v746
          %v750 = vunpack.c.3.f8e4m3b11 %v746
          %v751 = vand.u32 2147483647, %v747
          %vm752 = vcmp.gt.f32.partialorder %v751, 29.0
          %vm753 = vcmp.ne.f32.partialorder %v747, %v747
          %v754 = vmul.f32 %v747, 16.0
          %v755 = vsel %vm753, -0.0, %v754
          %v756 = vsel %vm752, nan, %v755
          %v757 = vand.u32 2147483647, %v748
          %vm758 = vcmp.gt.f32.partialorder %v757, 29.0
          %vm759 = vcmp.ne.f32.partialorder %v748, %v748
          %v760 = vmul.f32 %v748, 16.0
          %v761 = vsel %vm759, -0.0, %v760
          %v762 = vsel %vm758, nan, %v761
          %v763 = vand.u32 2147483647, %v749
          %vm764 = vcmp.gt.f32.partialorder %v763, 29.0
          %vm765 = vcmp.ne.f32.partialorder %v749, %v749
          %v766 = vmul.f32 %v749, 16.0
          %v767 = vsel %vm765, -0.0, %v766
          %v768 = vsel %vm764, nan, %v767
          %v769 = vand.u32 2147483647, %v750
          %vm770 = vcmp.gt.f32.partialorder %v769, 29.0
          %vm771 = vcmp.ne.f32.partialorder %v750, %v750
          %v772 = vmul.f32 %v750, 16.0
          %v773 = vsel %vm771, -0.0, %v772
          %v774 = vsel %vm770, nan, %v773
        $region59: #{fp8_linear_forward.3} parent=39
          #allocation16 [shape = 'u8[4096]{0}', space=vmem, size = 0x1000, scoped, tag = 'scoped memory for fp8_linear_forward.3']
          %775 = vst [vmem:[#allocation16] sm:$0xff] %v706
          %s776 = scalar_lea.vmem [#allocation16], 4
          %v777 = vld [vmem:[%s776] sm:$0x3]
          %v778 = vunpack.c.0.f8e4m3b11 %v777
          %v779 = vunpack.c.1.f8e4m3b11 %v777
          %v780 = vunpack.c.2.f8e4m3b11 %v777
          %v781 = vunpack.c.3.f8e4m3b11 %v777
          %v782 = vand.u32 2147483647, %v778
          %vm783 = vcmp.gt.f32.partialorder %v782, 29.0
          %vm784 = vcmp.ne.f32.partialorder %v778, %v778
          %v785 = vmul.f32 %v778, 16.0
          %v786 = vsel %vm784, -0.0, %v785
          %v787 = vsel %vm783, nan, %v786
          %v788 = vand.u32 2147483647, %v779
          %vm789 = vcmp.gt.f32.partialorder %v788, 29.0
          %vm790 = vcmp.ne.f32.partialorder %v779, %v779
          %v791 = vmul.f32 %v779, 16.0
          %v792 = vsel %vm790, -0.0, %v791
          %v793 = vsel %vm789, nan, %v792
          %v794 = vand.u32 2147483647, %v780
          %vm795 = vcmp.gt.f32.partialorder %v794, 29.0
          %vm796 = vcmp.ne.f32.partialorder %v780, %v780
          %v797 = vmul.f32 %v780, 16.0
          %v798 = vsel %vm796, -0.0, %v797
          %v799 = vsel %vm795, nan, %v798
          %v800 = vand.u32 2147483647, %v781
          %vm801 = vcmp.gt.f32.partialorder %v800, 29.0
          %vm802 = vcmp.ne.f32.partialorder %v781, %v781
          %v803 = vmul.f32 %v781, 16.0
          %v804 = vsel %vm802, -0.0, %v803
          %v805 = vsel %vm801, nan, %v804
        $region60: #{fp8_linear_forward.3} parent=39
          #allocation17 [shape = 'u8[4096]{0}', space=vmem, size = 0x1000, scoped, tag = 'scoped memory for fp8_linear_forward.3']
          %806 = vst [vmem:[#allocation17] sm:$0xff] %v706
          %s807 = scalar_lea.vmem [#allocation17], 6
          %v808 = vld [vmem:[%s807] sm:$0x3]
          %v809 = vunpack.c.0.f8e4m3b11 %v808
          %v810 = vunpack.c.1.f8e4m3b11 %v808
          %v811 = vunpack.c.2.f8e4m3b11 %v808
          %v812 = vunpack.c.3.f8e4m3b11 %v808
          %v813 = vand.u32 2147483647, %v809
          %vm814 = vcmp.gt.f32.partialorder %v813, 29.0
          %vm815 = vcmp.ne.f32.partialorder %v809, %v809
          %v816 = vmul.f32 %v809, 16.0
          %v817 = vsel %vm815, -0.0, %v816
          %v818 = vsel %vm814, nan, %v817
          %v819 = vand.u32 2147483647, %v810
          %vm820 = vcmp.gt.f32.partialorder %v819, 29.0
          %vm821 = vcmp.ne.f32.partialorder %v810, %v810
          %v822 = vmul.f32 %v810, 16.0
          %v823 = vsel %vm821, -0.0, %v822
          %v824 = vsel %vm820, nan, %v823
          %v825 = vand.u32 2147483647, %v811
          %vm826 = vcmp.gt.f32.partialorder %v825, 29.0
          %vm827 = vcmp.ne.f32.partialorder %v811, %v811
          %v828 = vmul.f32 %v811, 16.0
          %v829 = vsel %vm827, -0.0, %v828
          %v830 = vsel %vm826, nan, %v829
          %v831 = vand.u32 2147483647, %v812
          %vm832 = vcmp.gt.f32.partialorder %v831, 29.0
          %vm833 = vcmp.ne.f32.partialorder %v812, %v812
          %v834 = vmul.f32 %v812, 16.0
          %v835 = vsel %vm833, -0.0, %v834
          %v836 = vsel %vm832, nan, %v835
        $region61: #{fp8_linear_forward.3} parent=39
          #allocation18 [shape = 'u8[4096]{0}', space=vmem, size = 0x1000, scoped, tag = 'scoped memory for fp8_linear_forward.3']
          %837 = vst [vmem:[#allocation18] sm:$0xff] %v707
          %v838 = vld [vmem:[#allocation18] sm:$0x3]
          %v839 = vunpack.c.0.f8e4m3b11 %v838
          %v840 = vunpack.c.1.f8e4m3b11 %v838
          %v841 = vunpack.c.2.f8e4m3b11 %v838
          %v842 = vunpack.c.3.f8e4m3b11 %v838
          %v843 = vand.u32 2147483647, %v839
          %vm844 = vcmp.gt.f32.partialorder %v843, 29.0
          %vm845 = vcmp.ne.f32.partialorder %v839, %v839
          %v846 = vmul.f32 %v839, 16.0
          %v847 = vsel %vm845, -0.0, %v846
          %v848 = vsel %vm844, nan, %v847
          %v849 = vand.u32 2147483647, %v840
          %vm850 = vcmp.gt.f32.partialorder %v849, 29.0
          %vm851 = vcmp.ne.f32.partialorder %v840, %v840
          %v852 = vmul.f32 %v840, 16.0
          %v853 = vsel %vm851, -0.0, %v852
          %v854 = vsel %vm850, nan, %v853
          %v855 = vand.u32 2147483647, %v841
          %vm856 = vcmp.gt.f32.partialorder %v855, 29.0
          %vm857 = vcmp.ne.f32.partialorder %v841, %v841
          %v858 = vmul.f32 %v841, 16.0
          %v859 = vsel %vm857, -0.0, %v858
          %v860 = vsel %vm856, nan, %v859
          %v861 = vand.u32 2147483647, %v842
          %vm862 = vcmp.gt.f32.partialorder %v861, 29.0
          %vm863 = vcmp.ne.f32.partialorder %v842, %v842
          %v864 = vmul.f32 %v842, 16.0
          %v865 = vsel %vm863, -0.0, %v864
          %v866 = vsel %vm862, nan, %v865
        $region62: #{fp8_linear_forward.3} parent=39
          #allocation19 [shape = 'u8[4096]{0}', space=vmem, size = 0x1000, scoped, tag = 'scoped memory for fp8_linear_forward.3']
          %867 = vst [vmem:[#allocation19] sm:$0xff] %v707
          %s868 = scalar_lea.vmem [#allocation19], 2
          %v869 = vld [vmem:[%s868] sm:$0x3]
          %v870 = vunpack.c.0.f8e4m3b11 %v869
          %v871 = vunpack.c.1.f8e4m3b11 %v869
          %v872 = vunpack.c.2.f8e4m3b11 %v869
          %v873 = vunpack.c.3.f8e4m3b11 %v869
          %v874 = vand.u32 2147483647, %v870
          %vm875 = vcmp.gt.f32.partialorder %v874, 29.0
          %vm876 = vcmp.ne.f32.partialorder %v870, %v870
          %v877 = vmul.f32 %v870, 16.0
          %v878 = vsel %vm876, -0.0, %v877
          %v879 = vsel %vm875, nan, %v878
          %v880 = vand.u32 2147483647, %v871
          %vm881 = vcmp.gt.f32.partialorder %v880, 29.0
          %vm882 = vcmp.ne.f32.partialorder %v871, %v871
          %v883 = vmul.f32 %v871, 16.0
          %v884 = vsel %vm882, -0.0, %v883
          %v885 = vsel %vm881, nan, %v884
          %v886 = vand.u32 2147483647, %v872
          %vm887 = vcmp.gt.f32.partialorder %v886, 29.0
          %vm888 = vcmp.ne.f32.partialorder %v872, %v872
          %v889 = vmul.f32 %v872, 16.0
          %v890 = vsel %vm888, -0.0, %v889
          %v891 = vsel %vm887, nan, %v890
          %v892 = vand.u32 2147483647, %v873
          %vm893 = vcmp.gt.f32.partialorder %v892, 29.0
          %vm894 = vcmp.ne.f32.partialorder %v873, %v873
          %v895 = vmul.f32 %v873, 16.0
          %v896 = vsel %vm894, -0.0, %v895
          %v897 = vsel %vm893, nan, %v896
        $region63: #{fp8_linear_forward.3} parent=39
          #allocation20 [shape = 'u8[4096]{0}', space=vmem, size = 0x1000, scoped, tag = 'scoped memory for fp8_linear_forward.3']
          %898 = vst [vmem:[#allocation20] sm:$0xff] %v707
          %s899 = scalar_lea.vmem [#allocation20], 4
          %v900 = vld [vmem:[%s899] sm:$0x3]
          %v901 = vunpack.c.0.f8e4m3b11 %v900
          %v902 = vunpack.c.1.f8e4m3b11 %v900
          %v903 = vunpack.c.2.f8e4m3b11 %v900
          %v904 = vunpack.c.3.f8e4m3b11 %v900
          %v905 = vand.u32 2147483647, %v901
          %vm906 = vcmp.gt.f32.partialorder %v905, 29.0
          %vm907 = vcmp.ne.f32.partialorder %v901, %v901
          %v908 = vmul.f32 %v901, 16.0
          %v909 = vsel %vm907, -0.0, %v908
          %v910 = vsel %vm906, nan, %v909
          %v911 = vand.u32 2147483647, %v902
          %vm912 = vcmp.gt.f32.partialorder %v911, 29.0
          %vm913 = vcmp.ne.f32.partialorder %v902, %v902
          %v914 = vmul.f32 %v902, 16.0
          %v915 = vsel %vm913, -0.0, %v914
          %v916 = vsel %vm912, nan, %v915
          %v917 = vand.u32 2147483647, %v903
          %vm918 = vcmp.gt.f32.partialorder %v917, 29.0
          %vm919 = vcmp.ne.f32.partialorder %v903, %v903
          %v920 = vmul.f32 %v903, 16.0
          %v921 = vsel %vm919, -0.0, %v920
          %v922 = vsel %vm918, nan, %v921
          %v923 = vand.u32 2147483647, %v904
          %vm924 = vcmp.gt.f32.partialorder %v923, 29.0
          %vm925 = vcmp.ne.f32.partialorder %v904, %v904
          %v926 = vmul.f32 %v904, 16.0
          %v927 = vsel %vm925, -0.0, %v926
          %v928 = vsel %vm924, nan, %v927
        $region64: #{fp8_linear_forward.3} parent=39
          #allocation21 [shape = 'u8[4096]{0}', space=vmem, size = 0x1000, scoped, tag = 'scoped memory for fp8_linear_forward.3']
          %929 = vst [vmem:[#allocation21] sm:$0xff] %v707
          %s930 = scalar_lea.vmem [#allocation21], 6
          %v931 = vld [vmem:[%s930] sm:$0x3]
          %v932 = vunpack.c.0.f8e4m3b11 %v931
          %v933 = vunpack.c.1.f8e4m3b11 %v931
          %v934 = vunpack.c.2.f8e4m3b11 %v931
          %v935 = vunpack.c.3.f8e4m3b11 %v931
          %v936 = vand.u32 2147483647, %v932
          %vm937 = vcmp.gt.f32.partialorder %v936, 29.0
          %vm938 = vcmp.ne.f32.partialorder %v932, %v932
          %v939 = vmul.f32 %v932, 16.0
          %v940 = vsel %vm938, -0.0, %v939
          %v941 = vsel %vm937, nan, %v940
          %v942 = vand.u32 2147483647, %v933
          %vm943 = vcmp.gt.f32.partialorder %v942, 29.0
          %vm944 = vcmp.ne.f32.partialorder %v933, %v933
          %v945 = vmul.f32 %v933, 16.0
          %v946 = vsel %vm944, -0.0, %v945
          %v947 = vsel %vm943, nan, %v946
          %v948 = vand.u32 2147483647, %v934
          %vm949 = vcmp.gt.f32.partialorder %v948, 29.0
          %vm950 = vcmp.ne.f32.partialorder %v934, %v934
          %v951 = vmul.f32 %v934, 16.0
          %v952 = vsel %vm950, -0.0, %v951
          %v953 = vsel %vm949, nan, %v952
          %v954 = vand.u32 2147483647, %v935
          %vm955 = vcmp.gt.f32.partialorder %v954, 29.0
          %vm956 = vcmp.ne.f32.partialorder %v935, %v935
          %v957 = vmul.f32 %v935, 16.0
          %v958 = vsel %vm956, -0.0, %v957
          %v959 = vsel %vm955, nan, %v958
        $region65: #{fp8_linear_forward.3} parent=39
          #allocation22 [shape = 'u8[4096]{0}', space=vmem, size = 0x1000, scoped, tag = 'scoped memory for fp8_linear_forward.3']
          %960 = vst [vmem:[#allocation22] sm:$0xff] %v708
          %v961 = vld [vmem:[#allocation22] sm:$0x3]
          %v962 = vunpack.c.0.f8e4m3b11 %v961
          %v963 = vunpack.c.1.f8e4m3b11 %v961
          %v964 = vunpack.c.2.f8e4m3b11 %v961
          %v965 = vunpack.c.3.f8e4m3b11 %v961
          %v966 = vand.u32 2147483647, %v962
          %vm967 = vcmp.gt.f32.partialorder %v966, 29.0
          %vm968 = vcmp.ne.f32.partialorder %v962, %v962
          %v969 = vmul.f32 %v962, 16.0
          %v970 = vsel %vm968, -0.0, %v969
          %v971 = vsel %vm967, nan, %v970
          %v972 = vand.u32 2147483647, %v963
          %vm973 = vcmp.gt.f32.partialorder %v972, 29.0
          %vm974 = vcmp.ne.f32.partialorder %v963, %v963
          %v975 = vmul.f32 %v963, 16.0
          %v976 = vsel %vm974, -0.0, %v975
          %v977 = vsel %vm973, nan, %v976
          %v978 = vand.u32 2147483647, %v964
          %vm979 = vcmp.gt.f32.partialorder %v978, 29.0
          %vm980 = vcmp.ne.f32.partialorder %v964, %v964
          %v981 = vmul.f32 %v964, 16.0
          %v982 = vsel %vm980, -0.0, %v981
          %v983 = vsel %vm979, nan, %v982
          %v984 = vand.u32 2147483647, %v965
          %vm985 = vcmp.gt.f32.partialorder %v984, 29.0
          %vm986 = vcmp.ne.f32.partialorder %v965, %v965
          %v987 = vmul.f32 %v965, 16.0
          %v988 = vsel %vm986, -0.0, %v987
          %v989 = vsel %vm985, nan, %v988
        $region66: #{fp8_linear_forward.3} parent=39
          #allocation23 [shape = 'u8[4096]{0}', space=vmem, size = 0x1000, scoped, tag = 'scoped memory for fp8_linear_forward.3']
          %990 = vst [vmem:[#allocation23] sm:$0xff] %v708
          %s991 = scalar_lea.vmem [#allocation23], 2
          %v992 = vld [vmem:[%s991] sm:$0x3]
          %v993 = vunpack.c.0.f8e4m3b11 %v992
          %v994 = vunpack.c.1.f8e4m3b11 %v992
          %v995 = vunpack.c.2.f8e4m3b11 %v992
          %v996 = vunpack.c.3.f8e4m3b11 %v992
          %v997 = vand.u32 2147483647, %v993
          %vm998 = vcmp.gt.f32.partialorder %v997, 29.0
          %vm999 = vcmp.ne.f32.partialorder %v993, %v993
          %v1000 = vmul.f32 %v993, 16.0
          %v1001 = vsel %vm999, -0.0, %v1000
          %v1002 = vsel %vm998, nan, %v1001
          %v1003 = vand.u32 2147483647, %v994
          %vm1004 = vcmp.gt.f32.partialorder %v1003, 29.0
          %vm1005 = vcmp.ne.f32.partialorder %v994, %v994
          %v1006 = vmul.f32 %v994, 16.0
          %v1007 = vsel %vm1005, -0.0, %v1006
          %v1008 = vsel %vm1004, nan, %v1007
          %v1009 = vand.u32 2147483647, %v995
          %vm1010 = vcmp.gt.f32.partialorder %v1009, 29.0
          %vm1011 = vcmp.ne.f32.partialorder %v995, %v995
          %v1012 = vmul.f32 %v995, 16.0
          %v1013 = vsel %vm1011, -0.0, %v1012
          %v1014 = vsel %vm1010, nan, %v1013
          %v1015 = vand.u32 2147483647, %v996
          %vm1016 = vcmp.gt.f32.partialorder %v1015, 29.0
          %vm1017 = vcmp.ne.f32.partialorder %v996, %v996
          %v1018 = vmul.f32 %v996, 16.0
          %v1019 = vsel %vm1017, -0.0, %v1018
          %v1020 = vsel %vm1016, nan, %v1019
        $region67: #{fp8_linear_forward.3} parent=39
          #allocation24 [shape = 'u8[4096]{0}', space=vmem, size = 0x1000, scoped, tag = 'scoped memory for fp8_linear_forward.3']
          %1021 = vst [vmem:[#allocation24] sm:$0xff] %v708
          %s1022 = scalar_lea.vmem [#allocation24], 4
          %v1023 = vld [vmem:[%s1022] sm:$0x3]
          %v1024 = vunpack.c.0.f8e4m3b11 %v1023
          %v1025 = vunpack.c.1.f8e4m3b11 %v1023
          %v1026 = vunpack.c.2.f8e4m3b11 %v1023
          %v1027 = vunpack.c.3.f8e4m3b11 %v1023
          %v1028 = vand.u32 2147483647, %v1024
          %vm1029 = vcmp.gt.f32.partialorder %v1028, 29.0
          %vm1030 = vcmp.ne.f32.partialorder %v1024, %v1024
          %v1031 = vmul.f32 %v1024, 16.0
          %v1032 = vsel %vm1030, -0.0, %v1031
          %v1033 = vsel %vm1029, nan, %v1032
          %v1034 = vand.u32 2147483647, %v1025
          %vm1035 = vcmp.gt.f32.partialorder %v1034, 29.0
          %vm1036 = vcmp.ne.f32.partialorder %v1025, %v1025
          %v1037 = vmul.f32 %v1025, 16.0
          %v1038 = vsel %vm1036, -0.0, %v1037
          %v1039 = vsel %vm1035, nan, %v1038
          %v1040 = vand.u32 2147483647, %v1026
          %vm1041 = vcmp.gt.f32.partialorder %v1040, 29.0
          %vm1042 = vcmp.ne.f32.partialorder %v1026, %v1026
          %v1043 = vmul.f32 %v1026, 16.0
          %v1044 = vsel %vm1042, -0.0, %v1043
          %v1045 = vsel %vm1041, nan, %v1044
          %v1046 = vand.u32 2147483647, %v1027
          %vm1047 = vcmp.gt.f32.partialorder %v1046, 29.0
          %vm1048 = vcmp.ne.f32.partialorder %v1027, %v1027
          %v1049 = vmul.f32 %v1027, 16.0
          %v1050 = vsel %vm1048, -0.0, %v1049
          %v1051 = vsel %vm1047, nan, %v1050
        $region68: #{fp8_linear_forward.3} parent=39
          #allocation25 [shape = 'u8[4096]{0}', space=vmem, size = 0x1000, scoped, tag = 'scoped memory for fp8_linear_forward.3']
          %1052 = vst [vmem:[#allocation25] sm:$0xff] %v708
          %s1053 = scalar_lea.vmem [#allocation25], 6
          %v1054 = vld [vmem:[%s1053] sm:$0x3]
          %v1055 = vunpack.c.0.f8e4m3b11 %v1054
          %v1056 = vunpack.c.1.f8e4m3b11 %v1054
          %v1057 = vunpack.c.2.f8e4m3b11 %v1054
          %v1058 = vunpack.c.3.f8e4m3b11 %v1054
          %v1059 = vand.u32 2147483647, %v1055
          %vm1060 = vcmp.gt.f32.partialorder %v1059, 29.0
          %vm1061 = vcmp.ne.f32.partialorder %v1055, %v1055
          %v1062 = vmul.f32 %v1055, 16.0
          %v1063 = vsel %vm1061, -0.0, %v1062
          %v1064 = vsel %vm1060, nan, %v1063
          %v1065 = vand.u32 2147483647, %v1056
          %vm1066 = vcmp.gt.f32.partialorder %v1065, 29.0
          %vm1067 = vcmp.ne.f32.partialorder %v1056, %v1056
          %v1068 = vmul.f32 %v1056, 16.0
          %v1069 = vsel %vm1067, -0.0, %v1068
          %v1070 = vsel %vm1066, nan, %v1069
          %v1071 = vand.u32 2147483647, %v1057
          %vm1072 = vcmp.gt.f32.partialorder %v1071, 29.0
          %vm1073 = vcmp.ne.f32.partialorder %v1057, %v1057
          %v1074 = vmul.f32 %v1057, 16.0
          %v1075 = vsel %vm1073, -0.0, %v1074
          %v1076 = vsel %vm1072, nan, %v1075
          %v1077 = vand.u32 2147483647, %v1058
          %vm1078 = vcmp.gt.f32.partialorder %v1077, 29.0
          %vm1079 = vcmp.ne.f32.partialorder %v1058, %v1058
          %v1080 = vmul.f32 %v1058, 16.0
          %v1081 = vsel %vm1079, -0.0, %v1080
          %v1082 = vsel %vm1078, nan, %v1081
        $region69: #{fp8_linear_forward.3} parent=39
          #allocation26 [shape = 'u8[4096]{0}', space=vmem, size = 0x1000, scoped, tag = 'scoped memory for fp8_linear_forward.3']
          %1083 = vst [vmem:[#allocation26] sm:$0xff] %v709
          %v1084 = vld [vmem:[#allocation26] sm:$0x3]
          %v1085 = vunpack.c.0.f8e4m3b11 %v1084
          %v1086 = vunpack.c.1.f8e4m3b11 %v1084
          %v1087 = vunpack.c.2.f8e4m3b11 %v1084
          %v1088 = vunpack.c.3.f8e4m3b11 %v1084
          %v1089 = vand.u32 2147483647, %v1085
          %vm1090 = vcmp.gt.f32.partialorder %v1089, 29.0
          %vm1091 = vcmp.ne.f32.partialorder %v1085, %v1085
          %v1092 = vmul.f32 %v1085, 16.0
          %v1093 = vsel %vm1091, -0.0, %v1092
          %v1094 = vsel %vm1090, nan, %v1093
          %v1095 = vand.u32 2147483647, %v1086
          %vm1096 = vcmp.gt.f32.partialorder %v1095, 29.0
          %vm1097 = vcmp.ne.f32.partialorder %v1086, %v1086
          %v1098 = vmul.f32 %v1086, 16.0
          %v1099 = vsel %vm1097, -0.0, %v1098
          %v1100 = vsel %vm1096, nan, %v1099
          %v1101 = vand.u32 2147483647, %v1087
          %vm1102 = vcmp.gt.f32.partialorder %v1101, 29.0
          %vm1103 = vcmp.ne.f32.partialorder %v1087, %v1087
          %v1104 = vmul.f32 %v1087, 16.0
          %v1105 = vsel %vm1103, -0.0, %v1104
          %v1106 = vsel %vm1102, nan, %v1105
          %v1107 = vand.u32 2147483647, %v1088
          %vm1108 = vcmp.gt.f32.partialorder %v1107, 29.0
          %vm1109 = vcmp.ne.f32.partialorder %v1088, %v1088
          %v1110 = vmul.f32 %v1088, 16.0
          %v1111 = vsel %vm1109, -0.0, %v1110
          %v1112 = vsel %vm1108, nan, %v1111
        $region70: #{fp8_linear_forward.3} parent=39
          #allocation27 [shape = 'u8[4096]{0}', space=vmem, size = 0x1000, scoped, tag = 'scoped memory for fp8_linear_forward.3']
          %1113 = vst [vmem:[#allocation27] sm:$0xff] %v709
          %s1114 = scalar_lea.vmem [#allocation27], 2
          %v1115 = vld [vmem:[%s1114] sm:$0x3]
          %v1116 = vunpack.c.0.f8e4m3b11 %v1115
          %v1117 = vunpack.c.1.f8e4m3b11 %v1115
          %v1118 = vunpack.c.2.f8e4m3b11 %v1115
          %v1119 = vunpack.c.3.f8e4m3b11 %v1115
          %v1120 = vand.u32 2147483647, %v1116
          %vm1121 = vcmp.gt.f32.partialorder %v1120, 29.0
          %vm1122 = vcmp.ne.f32.partialorder %v1116, %v1116
          %v1123 = vmul.f32 %v1116, 16.0
          %v1124 = vsel %vm1122, -0.0, %v1123
          %v1125 = vsel %vm1121, nan, %v1124
          %v1126 = vand.u32 2147483647, %v1117
          %vm1127 = vcmp.gt.f32.partialorder %v1126, 29.0
          %vm1128 = vcmp.ne.f32.partialorder %v1117, %v1117
          %v1129 = vmul.f32 %v1117, 16.0
          %v1130 = vsel %vm1128, -0.0, %v1129
          %v1131 = vsel %vm1127, nan, %v1130
          %v1132 = vand.u32 2147483647, %v1118
          %vm1133 = vcmp.gt.f32.partialorder %v1132, 29.0
          %vm1134 = vcmp.ne.f32.partialorder %v1118, %v1118
          %v1135 = vmul.f32 %v1118, 16.0
          %v1136 = vsel %vm1134, -0.0, %v1135
          %v1137 = vsel %vm1133, nan, %v1136
          %v1138 = vand.u32 2147483647, %v1119
          %vm1139 = vcmp.gt.f32.partialorder %v1138, 29.0
          %vm1140 = vcmp.ne.f32.partialorder %v1119, %v1119
          %v1141 = vmul.f32 %v1119, 16.0
          %v1142 = vsel %vm1140, -0.0, %v1141
          %v1143 = vsel %vm1139, nan, %v1142
        $region71: #{fp8_linear_forward.3} parent=39
          #allocation28 [shape = 'u8[4096]{0}', space=vmem, size = 0x1000, scoped, tag = 'scoped memory for fp8_linear_forward.3']
          %1144 = vst [vmem:[#allocation28] sm:$0xff] %v709
          %s1145 = scalar_lea.vmem [#allocation28], 4
          %v1146 = vld [vmem:[%s1145] sm:$0x3]
          %v1147 = vunpack.c.0.f8e4m3b11 %v1146
          %v1148 = vunpack.c.1.f8e4m3b11 %v1146
          %v1149 = vunpack.c.2.f8e4m3b11 %v1146
          %v1150 = vunpack.c.3.f8e4m3b11 %v1146
          %v1151 = vand.u32 2147483647, %v1147
          %vm1152 = vcmp.gt.f32.partialorder %v1151, 29.0
          %vm1153 = vcmp.ne.f32.partialorder %v1147, %v1147
          %v1154 = vmul.f32 %v1147, 16.0
          %v1155 = vsel %vm1153, -0.0, %v1154
          %v1156 = vsel %vm1152, nan, %v1155
          %v1157 = vand.u32 2147483647, %v1148
          %vm1158 = vcmp.gt.f32.partialorder %v1157, 29.0
          %vm1159 = vcmp.ne.f32.partialorder %v1148, %v1148
          %v1160 = vmul.f32 %v1148, 16.0
          %v1161 = vsel %vm1159, -0.0, %v1160
          %v1162 = vsel %vm1158, nan, %v1161
          %v1163 = vand.u32 2147483647, %v1149
          %vm1164 = vcmp.gt.f32.partialorder %v1163, 29.0
          %vm1165 = vcmp.ne.f32.partialorder %v1149, %v1149
          %v1166 = vmul.f32 %v1149, 16.0
          %v1167 = vsel %vm1165, -0.0, %v1166
          %v1168 = vsel %vm1164, nan, %v1167
          %v1169 = vand.u32 2147483647, %v1150
          %vm1170 = vcmp.gt.f32.partialorder %v1169, 29.0
          %vm1171 = vcmp.ne.f32.partialorder %v1150, %v1150
          %v1172 = vmul.f32 %v1150, 16.0
          %v1173 = vsel %vm1171, -0.0, %v1172
          %v1174 = vsel %vm1170, nan, %v1173
        $region72: #{fp8_linear_forward.3} parent=39
          #allocation29 [shape = 'u8[4096]{0}', space=vmem, size = 0x1000, scoped, tag = 'scoped memory for fp8_linear_forward.3']
          %1175 = vst [vmem:[#allocation29] sm:$0xff] %v709
          %s1176 = scalar_lea.vmem [#allocation29], 6
          %v1177 = vld [vmem:[%s1176] sm:$0x3]
          %v1178 = vunpack.c.0.f8e4m3b11 %v1177
          %v1179 = vunpack.c.1.f8e4m3b11 %v1177
          %v1180 = vunpack.c.2.f8e4m3b11 %v1177
          %v1181 = vunpack.c.3.f8e4m3b11 %v1177
          %v1182 = vand.u32 2147483647, %v1178
          %vm1183 = vcmp.gt.f32.partialorder %v1182, 29.0
          %vm1184 = vcmp.ne.f32.partialorder %v1178, %v1178
          %v1185 = vmul.f32 %v1178, 16.0
          %v1186 = vsel %vm1184, -0.0, %v1185
          %v1187 = vsel %vm1183, nan, %v1186
          %v1188 = vand.u32 2147483647, %v1179
          %vm1189 = vcmp.gt.f32.partialorder %v1188, 29.0
          %vm1190 = vcmp.ne.f32.partialorder %v1179, %v1179
          %v1191 = vmul.f32 %v1179, 16.0
          %v1192 = vsel %vm1190, -0.0, %v1191
          %v1193 = vsel %vm1189, nan, %v1192
          %v1194 = vand.u32 2147483647, %v1180
          %vm1195 = vcmp.gt.f32.partialorder %v1194, 29.0
          %vm1196 = vcmp.ne.f32.partialorder %v1180, %v1180
          %v1197 = vmul.f32 %v1180, 16.0
          %v1198 = vsel %vm1196, -0.0, %v1197
          %v1199 = vsel %vm1195, nan, %v1198
          %v1200 = vand.u32 2147483647, %v1181
          %vm1201 = vcmp.gt.f32.partialorder %v1200, 29.0
          %vm1202 = vcmp.ne.f32.partialorder %v1181, %v1181
          %v1203 = vmul.f32 %v1181, 16.0
          %v1204 = vsel %vm1202, -0.0, %v1203
          %v1205 = vsel %vm1201, nan, %v1204
        $region73: #{fp8_linear_forward.3} parent=39
          #allocation30 [shape = 'u8[4096]{0}', space=vmem, size = 0x1000, scoped, tag = 'scoped memory for fp8_linear_forward.3']
          %1206 = vst [vmem:[#allocation30] sm:$0xff] %v710
          %v1207 = vld [vmem:[#allocation30] sm:$0x3]
          %v1208 = vunpack.c.0.f8e4m3b11 %v1207
          %v1209 = vunpack.c.1.f8e4m3b11 %v1207
          %v1210 = vunpack.c.2.f8e4m3b11 %v1207
          %v1211 = vunpack.c.3.f8e4m3b11 %v1207
          %v1212 = vand.u32 2147483647, %v1208
          %vm1213 = vcmp.gt.f32.partialorder %v1212, 29.0
          %vm1214 = vcmp.ne.f32.partialorder %v1208, %v1208
          %v1215 = vmul.f32 %v1208, 16.0
          %v1216 = vsel %vm1214, -0.0, %v1215
          %v1217 = vsel %vm1213, nan, %v1216
          %v1218 = vand.u32 2147483647, %v1209
          %vm1219 = vcmp.gt.f32.partialorder %v1218, 29.0
          %vm1220 = vcmp.ne.f32.partialorder %v1209, %v1209
          %v1221 = vmul.f32 %v1209, 16.0
          %v1222 = vsel %vm1220, -0.0, %v1221
          %v1223 = vsel %vm1219, nan, %v1222
          %v1224 = vand.u32 2147483647, %v1210
          %vm1225 = vcmp.gt.f32.partialorder %v1224, 29.0
          %vm1226 = vcmp.ne.f32.partialorder %v1210, %v1210
          %v1227 = vmul.f32 %v1210, 16.0
          %v1228 = vsel %vm1226, -0.0, %v1227
          %v1229 = vsel %vm1225, nan, %v1228
          %v1230 = vand.u32 2147483647, %v1211
          %vm1231 = vcmp.gt.f32.partialorder %v1230, 29.0
          %vm1232 = vcmp.ne.f32.partialorder %v1211, %v1211
          %v1233 = vmul.f32 %v1211, 16.0
          %v1234 = vsel %vm1232, -0.0, %v1233
          %v1235 = vsel %vm1231, nan, %v1234
        $region74: #{fp8_linear_forward.3} parent=39
          #allocation31 [shape = 'u8[4096]{0}', space=vmem, size = 0x1000, scoped, tag = 'scoped memory for fp8_linear_forward.3']
          %1236 = vst [vmem:[#allocation31] sm:$0xff] %v710
          %s1237 = scalar_lea.vmem [#allocation31], 2
          %v1238 = vld [vmem:[%s1237] sm:$0x3]
          %v1239 = vunpack.c.0.f8e4m3b11 %v1238
          %v1240 = vunpack.c.1.f8e4m3b11 %v1238
          %v1241 = vunpack.c.2.f8e4m3b11 %v1238
          %v1242 = vunpack.c.3.f8e4m3b11 %v1238
          %v1243 = vand.u32 2147483647, %v1239
          %vm1244 = vcmp.gt.f32.partialorder %v1243, 29.0
          %vm1245 = vcmp.ne.f32.partialorder %v1239, %v1239
          %v1246 = vmul.f32 %v1239, 16.0
          %v1247 = vsel %vm1245, -0.0, %v1246
          %v1248 = vsel %vm1244, nan, %v1247
          %v1249 = vand.u32 2147483647, %v1240
          %vm1250 = vcmp.gt.f32.partialorder %v1249, 29.0
          %vm1251 = vcmp.ne.f32.partialorder %v1240, %v1240
          %v1252 = vmul.f32 %v1240, 16.0
          %v1253 = vsel %vm1251, -0.0, %v1252
          %v1254 = vsel %vm1250, nan, %v1253
          %v1255 = vand.u32 2147483647, %v1241
          %vm1256 = vcmp.gt.f32.partialorder %v1255, 29.0
          %vm1257 = vcmp.ne.f32.partialorder %v1241, %v1241
          %v1258 = vmul.f32 %v1241, 16.0
          %v1259 = vsel %vm1257, -0.0, %v1258
          %v1260 = vsel %vm1256, nan, %v1259
          %v1261 = vand.u32 2147483647, %v1242
          %vm1262 = vcmp.gt.f32.partialorder %v1261, 29.0
          %vm1263 = vcmp.ne.f32.partialorder %v1242, %v1242
          %v1264 = vmul.f32 %v1242, 16.0
          %v1265 = vsel %vm1263, -0.0, %v1264
          %v1266 = vsel %vm1262, nan, %v1265
        $region75: #{fp8_linear_forward.3} parent=39
          #allocation32 [shape = 'u8[4096]{0}', space=vmem, size = 0x1000, scoped, tag = 'scoped memory for fp8_linear_forward.3']
          %1267 = vst [vmem:[#allocation32] sm:$0xff] %v710
          %s1268 = scalar_lea.vmem [#allocation32], 4
          %v1269 = vld [vmem:[%s1268] sm:$0x3]
          %v1270 = vunpack.c.0.f8e4m3b11 %v1269
          %v1271 = vunpack.c.1.f8e4m3b11 %v1269
          %v1272 = vunpack.c.2.f8e4m3b11 %v1269
          %v1273 = vunpack.c.3.f8e4m3b11 %v1269
          %v1274 = vand.u32 2147483647, %v1270
          %vm1275 = vcmp.gt.f32.partialorder %v1274, 29.0
          %vm1276 = vcmp.ne.f32.partialorder %v1270, %v1270
          %v1277 = vmul.f32 %v1270, 16.0
          %v1278 = vsel %vm1276, -0.0, %v1277
          %v1279 = vsel %vm1275, nan, %v1278
          %v1280 = vand.u32 2147483647, %v1271
          %vm1281 = vcmp.gt.f32.partialorder %v1280, 29.0
          %vm1282 = vcmp.ne.f32.partialorder %v1271, %v1271
          %v1283 = vmul.f32 %v1271, 16.0
          %v1284 = vsel %vm1282, -0.0, %v1283
          %v1285 = vsel %vm1281, nan, %v1284
          %v1286 = vand.u32 2147483647, %v1272
          %vm1287 = vcmp.gt.f32.partialorder %v1286, 29.0
          %vm1288 = vcmp.ne.f32.partialorder %v1272, %v1272
          %v1289 = vmul.f32 %v1272, 16.0
          %v1290 = vsel %vm1288, -0.0, %v1289
          %v1291 = vsel %vm1287, nan, %v1290
          %v1292 = vand.u32 2147483647, %v1273
          %vm1293 = vcmp.gt.f32.partialorder %v1292, 29.0
          %vm1294 = vcmp.ne.f32.partialorder %v1273, %v1273
          %v1295 = vmul.f32 %v1273, 16.0
          %v1296 = vsel %vm1294, -0.0, %v1295
          %v1297 = vsel %vm1293, nan, %v1296
        $region76: #{fp8_linear_forward.3} parent=39
          #allocation33 [shape = 'u8[4096]{0}', space=vmem, size = 0x1000, scoped, tag = 'scoped memory for fp8_linear_forward.3']
          %1298 = vst [vmem:[#allocation33] sm:$0xff] %v710
          %s1299 = scalar_lea.vmem [#allocation33], 6
          %v1300 = vld [vmem:[%s1299] sm:$0x3]
          %v1301 = vunpack.c.0.f8e4m3b11 %v1300
          %v1302 = vunpack.c.1.f8e4m3b11 %v1300
          %v1303 = vunpack.c.2.f8e4m3b11 %v1300
          %v1304 = vunpack.c.3.f8e4m3b11 %v1300
          %v1305 = vand.u32 2147483647, %v1301
          %vm1306 = vcmp.gt.f32.partialorder %v1305, 29.0
          %vm1307 = vcmp.ne.f32.partialorder %v1301, %v1301
          %v1308 = vmul.f32 %v1301, 16.0
          %v1309 = vsel %vm1307, -0.0, %v1308
          %v1310 = vsel %vm1306, nan, %v1309
          %v1311 = vand.u32 2147483647, %v1302
          %vm1312 = vcmp.gt.f32.partialorder %v1311, 29.0
          %vm1313 = vcmp.ne.f32.partialorder %v1302, %v1302
          %v1314 = vmul.f32 %v1302, 16.0
          %v1315 = vsel %vm1313, -0.0, %v1314
          %v1316 = vsel %vm1312, nan, %v1315
          %v1317 = vand.u32 2147483647, %v1303
          %vm1318 = vcmp.gt.f32.partialorder %v1317, 29.0
          %vm1319 = vcmp.ne.f32.partialorder %v1303, %v1303
          %v1320 = vmul.f32 %v1303, 16.0
          %v1321 = vsel %vm1319, -0.0, %v1320
          %v1322 = vsel %vm1318, nan, %v1321
          %v1323 = vand.u32 2147483647, %v1304
          %vm1324 = vcmp.gt.f32.partialorder %v1323, 29.0
          %vm1325 = vcmp.ne.f32.partialorder %v1304, %v1304
          %v1326 = vmul.f32 %v1304, 16.0
          %v1327 = vsel %vm1325, -0.0, %v1326
          %v1328 = vsel %vm1324, nan, %v1327
        $region77: #{fp8_linear_forward.3} parent=39
          #allocation34 [shape = 'u8[4096]{0}', space=vmem, size = 0x1000, scoped, tag = 'scoped memory for fp8_linear_forward.3']
          %1329 = vst [vmem:[#allocation34] sm:$0xff] %v711
          %v1330 = vld [vmem:[#allocation34] sm:$0x3]
          %v1331 = vunpack.c.0.f8e4m3b11 %v1330
          %v1332 = vunpack.c.1.f8e4m3b11 %v1330
          %v1333 = vunpack.c.2.f8e4m3b11 %v1330
          %v1334 = vunpack.c.3.f8e4m3b11 %v1330
          %v1335 = vand.u32 2147483647, %v1331
          %vm1336 = vcmp.gt.f32.partialorder %v1335, 29.0
          %vm1337 = vcmp.ne.f32.partialorder %v1331, %v1331
          %v1338 = vmul.f32 %v1331, 16.0
          %v1339 = vsel %vm1337, -0.0, %v1338
          %v1340 = vsel %vm1336, nan, %v1339
          %v1341 = vand.u32 2147483647, %v1332
          %vm1342 = vcmp.gt.f32.partialorder %v1341, 29.0
          %vm1343 = vcmp.ne.f32.partialorder %v1332, %v1332
          %v1344 = vmul.f32 %v1332, 16.0
          %v1345 = vsel %vm1343, -0.0, %v1344
          %v1346 = vsel %vm1342, nan, %v1345
          %v1347 = vand.u32 2147483647, %v1333
          %vm1348 = vcmp.gt.f32.partialorder %v1347, 29.0
          %vm1349 = vcmp.ne.f32.partialorder %v1333, %v1333
          %v1350 = vmul.f32 %v1333, 16.0
          %v1351 = vsel %vm1349, -0.0, %v1350
          %v1352 = vsel %vm1348, nan, %v1351
          %v1353 = vand.u32 2147483647, %v1334
          %vm1354 = vcmp.gt.f32.partialorder %v1353, 29.0
          %vm1355 = vcmp.ne.f32.partialorder %v1334, %v1334
          %v1356 = vmul.f32 %v1334, 16.0
          %v1357 = vsel %vm1355, -0.0, %v1356
          %v1358 = vsel %vm1354, nan, %v1357
        $region78: #{fp8_linear_forward.3} parent=39
          #allocation35 [shape = 'u8[4096]{0}', space=vmem, size = 0x1000, scoped, tag = 'scoped memory for fp8_linear_forward.3']
          %1359 = vst [vmem:[#allocation35] sm:$0xff] %v711
          %s1360 = scalar_lea.vmem [#allocation35], 2
          %v1361 = vld [vmem:[%s1360] sm:$0x3]
          %v1362 = vunpack.c.0.f8e4m3b11 %v1361
          %v1363 = vunpack.c.1.f8e4m3b11 %v1361
          %v1364 = vunpack.c.2.f8e4m3b11 %v1361
          %v1365 = vunpack.c.3.f8e4m3b11 %v1361
          %v1366 = vand.u32 2147483647, %v1362
          %vm1367 = vcmp.gt.f32.partialorder %v1366, 29.0
          %vm1368 = vcmp.ne.f32.partialorder %v1362, %v1362
          %v1369 = vmul.f32 %v1362, 16.0
          %v1370 = vsel %vm1368, -0.0, %v1369
          %v1371 = vsel %vm1367, nan, %v1370
          %v1372 = vand.u32 2147483647, %v1363
          %vm1373 = vcmp.gt.f32.partialorder %v1372, 29.0
          %vm1374 = vcmp.ne.f32.partialorder %v1363, %v1363
          %v1375 = vmul.f32 %v1363, 16.0
          %v1376 = vsel %vm1374, -0.0, %v1375
          %v1377 = vsel %vm1373, nan, %v1376
          %v1378 = vand.u32 2147483647, %v1364
          %vm1379 = vcmp.gt.f32.partialorder %v1378, 29.0
          %vm1380 = vcmp.ne.f32.partialorder %v1364, %v1364
          %v1381 = vmul.f32 %v1364, 16.0
          %v1382 = vsel %vm1380, -0.0, %v1381
          %v1383 = vsel %vm1379, nan, %v1382
          %v1384 = vand.u32 2147483647, %v1365
          %vm1385 = vcmp.gt.f32.partialorder %v1384, 29.0
          %vm1386 = vcmp.ne.f32.partialorder %v1365, %v1365
          %v1387 = vmul.f32 %v1365, 16.0
          %v1388 = vsel %vm1386, -0.0, %v1387
          %v1389 = vsel %vm1385, nan, %v1388
        $region79: #{fp8_linear_forward.3} parent=39
          #allocation36 [shape = 'u8[4096]{0}', space=vmem, size = 0x1000, scoped, tag = 'scoped memory for fp8_linear_forward.3']
          %1390 = vst [vmem:[#allocation36] sm:$0xff] %v711
          %s1391 = scalar_lea.vmem [#allocation36], 4
          %v1392 = vld [vmem:[%s1391] sm:$0x3]
          %v1393 = vunpack.c.0.f8e4m3b11 %v1392
          %v1394 = vunpack.c.1.f8e4m3b11 %v1392
          %v1395 = vunpack.c.2.f8e4m3b11 %v1392
          %v1396 = vunpack.c.3.f8e4m3b11 %v1392
          %v1397 = vand.u32 2147483647, %v1393
          %vm1398 = vcmp.gt.f32.partialorder %v1397, 29.0
          %vm1399 = vcmp.ne.f32.partialorder %v1393, %v1393
          %v1400 = vmul.f32 %v1393, 16.0
          %v1401 = vsel %vm1399, -0.0, %v1400
          %v1402 = vsel %vm1398, nan, %v1401
          %v1403 = vand.u32 2147483647, %v1394
          %vm1404 = vcmp.gt.f32.partialorder %v1403, 29.0
          %vm1405 = vcmp.ne.f32.partialorder %v1394, %v1394
          %v1406 = vmul.f32 %v1394, 16.0
          %v1407 = vsel %vm1405, -0.0, %v1406
          %v1408 = vsel %vm1404, nan, %v1407
          %v1409 = vand.u32 2147483647, %v1395
          %vm1410 = vcmp.gt.f32.partialorder %v1409, 29.0
          %vm1411 = vcmp.ne.f32.partialorder %v1395, %v1395
          %v1412 = vmul.f32 %v1395, 16.0
          %v1413 = vsel %vm1411, -0.0, %v1412
          %v1414 = vsel %vm1410, nan, %v1413
          %v1415 = vand.u32 2147483647, %v1396
          %vm1416 = vcmp.gt.f32.partialorder %v1415, 29.0
          %vm1417 = vcmp.ne.f32.partialorder %v1396, %v1396
          %v1418 = vmul.f32 %v1396, 16.0
          %v1419 = vsel %vm1417, -0.0, %v1418
          %v1420 = vsel %vm1416, nan, %v1419
        $region80: #{fp8_linear_forward.3} parent=39
          #allocation37 [shape = 'u8[4096]{0}', space=vmem, size = 0x1000, scoped, tag = 'scoped memory for fp8_linear_forward.3']
          %1421 = vst [vmem:[#allocation37] sm:$0xff] %v711
          %s1422 = scalar_lea.vmem [#allocation37], 6
          %v1423 = vld [vmem:[%s1422] sm:$0x3]
          %v1424 = vunpack.c.0.f8e4m3b11 %v1423
          %v1425 = vunpack.c.1.f8e4m3b11 %v1423
          %v1426 = vunpack.c.2.f8e4m3b11 %v1423
          %v1427 = vunpack.c.3.f8e4m3b11 %v1423
          %v1428 = vand.u32 2147483647, %v1424
          %vm1429 = vcmp.gt.f32.partialorder %v1428, 29.0
          %vm1430 = vcmp.ne.f32.partialorder %v1424, %v1424
          %v1431 = vmul.f32 %v1424, 16.0
          %v1432 = vsel %vm1430, -0.0, %v1431
          %v1433 = vsel %vm1429, nan, %v1432
          %v1434 = vand.u32 2147483647, %v1425
          %vm1435 = vcmp.gt.f32.partialorder %v1434, 29.0
          %vm1436 = vcmp.ne.f32.partialorder %v1425, %v1425
          %v1437 = vmul.f32 %v1425, 16.0
          %v1438 = vsel %vm1436, -0.0, %v1437
          %v1439 = vsel %vm1435, nan, %v1438
          %v1440 = vand.u32 2147483647, %v1426
          %vm1441 = vcmp.gt.f32.partialorder %v1440, 29.0
          %vm1442 = vcmp.ne.f32.partialorder %v1426, %v1426
          %v1443 = vmul.f32 %v1426, 16.0
          %v1444 = vsel %vm1442, -0.0, %v1443
          %v1445 = vsel %vm1441, nan, %v1444
          %v1446 = vand.u32 2147483647, %v1427
          %vm1447 = vcmp.gt.f32.partialorder %v1446, 29.0
          %vm1448 = vcmp.ne.f32.partialorder %v1427, %v1427
          %v1449 = vmul.f32 %v1427, 16.0
          %v1450 = vsel %vm1448, -0.0, %v1449
          %v1451 = vsel %vm1447, nan, %v1450
        $region81: #{fp8_linear_forward.3} parent=39
          #allocation38 [shape = 'u8[4096]{0}', space=vmem, size = 0x1000, scoped, tag = 'scoped memory for fp8_linear_forward.3']
          %1452 = vst [vmem:[#allocation38] sm:$0xff] %v712
          %v1453 = vld [vmem:[#allocation38] sm:$0x3]
          %v1454 = vunpack.c.0.f8e4m3b11 %v1453
          %v1455 = vunpack.c.1.f8e4m3b11 %v1453
          %v1456 = vunpack.c.2.f8e4m3b11 %v1453
          %v1457 = vunpack.c.3.f8e4m3b11 %v1453
          %v1458 = vand.u32 2147483647, %v1454
          %vm1459 = vcmp.gt.f32.partialorder %v1458, 29.0
          %vm1460 = vcmp.ne.f32.partialorder %v1454, %v1454
          %v1461 = vmul.f32 %v1454, 16.0
          %v1462 = vsel %vm1460, -0.0, %v1461
          %v1463 = vsel %vm1459, nan, %v1462
          %v1464 = vand.u32 2147483647, %v1455
          %vm1465 = vcmp.gt.f32.partialorder %v1464, 29.0
          %vm1466 = vcmp.ne.f32.partialorder %v1455, %v1455
          %v1467 = vmul.f32 %v1455, 16.0
          %v1468 = vsel %vm1466, -0.0, %v1467
          %v1469 = vsel %vm1465, nan, %v1468
          %v1470 = vand.u32 2147483647, %v1456
          %vm1471 = vcmp.gt.f32.partialorder %v1470, 29.0
          %vm1472 = vcmp.ne.f32.partialorder %v1456, %v1456
          %v1473 = vmul.f32 %v1456, 16.0
          %v1474 = vsel %vm1472, -0.0, %v1473
          %v1475 = vsel %vm1471, nan, %v1474
          %v1476 = vand.u32 2147483647, %v1457
          %vm1477 = vcmp.gt.f32.partialorder %v1476, 29.0
          %vm1478 = vcmp.ne.f32.partialorder %v1457, %v1457
          %v1479 = vmul.f32 %v1457, 16.0
          %v1480 = vsel %vm1478, -0.0, %v1479
          %v1481 = vsel %vm1477, nan, %v1480
        $region82: #{fp8_linear_forward.3} parent=39
          #allocation39 [shape = 'u8[4096]{0}', space=vmem, size = 0x1000, scoped, tag = 'scoped memory for fp8_linear_forward.3']
          %1482 = vst [vmem:[#allocation39] sm:$0xff] %v712
          %s1483 = scalar_lea.vmem [#allocation39], 2
          %v1484 = vld [vmem:[%s1483] sm:$0x3]
          %v1485 = vunpack.c.0.f8e4m3b11 %v1484
          %v1486 = vunpack.c.1.f8e4m3b11 %v1484
          %v1487 = vunpack.c.2.f8e4m3b11 %v1484
          %v1488 = vunpack.c.3.f8e4m3b11 %v1484
          %v1489 = vand.u32 2147483647, %v1485
          %vm1490 = vcmp.gt.f32.partialorder %v1489, 29.0
          %vm1491 = vcmp.ne.f32.partialorder %v1485, %v1485
          %v1492 = vmul.f32 %v1485, 16.0
          %v1493 = vsel %vm1491, -0.0, %v1492
          %v1494 = vsel %vm1490, nan, %v1493
          %v1495 = vand.u32 2147483647, %v1486
          %vm1496 = vcmp.gt.f32.partialorder %v1495, 29.0
          %vm1497 = vcmp.ne.f32.partialorder %v1486, %v1486
          %v1498 = vmul.f32 %v1486, 16.0
          %v1499 = vsel %vm1497, -0.0, %v1498
          %v1500 = vsel %vm1496, nan, %v1499
          %v1501 = vand.u32 2147483647, %v1487
          %vm1502 = vcmp.gt.f32.partialorder %v1501, 29.0
          %vm1503 = vcmp.ne.f32.partialorder %v1487, %v1487
          %v1504 = vmul.f32 %v1487, 16.0
          %v1505 = vsel %vm1503, -0.0, %v1504
          %v1506 = vsel %vm1502, nan, %v1505
          %v1507 = vand.u32 2147483647, %v1488
          %vm1508 = vcmp.gt.f32.partialorder %v1507, 29.0
          %vm1509 = vcmp.ne.f32.partialorder %v1488, %v1488
          %v1510 = vmul.f32 %v1488, 16.0
          %v1511 = vsel %vm1509, -0.0, %v1510
          %v1512 = vsel %vm1508, nan, %v1511
        $region83: #{fp8_linear_forward.3} parent=39
          #allocation40 [shape = 'u8[4096]{0}', space=vmem, size = 0x1000, scoped, tag = 'scoped memory for fp8_linear_forward.3']
          %1513 = vst [vmem:[#allocation40] sm:$0xff] %v712
          %s1514 = scalar_lea.vmem [#allocation40], 4
          %v1515 = vld [vmem:[%s1514] sm:$0x3]
          %v1516 = vunpack.c.0.f8e4m3b11 %v1515
          %v1517 = vunpack.c.1.f8e4m3b11 %v1515
          %v1518 = vunpack.c.2.f8e4m3b11 %v1515
          %v1519 = vunpack.c.3.f8e4m3b11 %v1515
          %v1520 = vand.u32 2147483647, %v1516
          %vm1521 = vcmp.gt.f32.partialorder %v1520, 29.0
          %vm1522 = vcmp.ne.f32.partialorder %v1516, %v1516
          %v1523 = vmul.f32 %v1516, 16.0
          %v1524 = vsel %vm1522, -0.0, %v1523
          %v1525 = vsel %vm1521, nan, %v1524
          %v1526 = vand.u32 2147483647, %v1517
          %vm1527 = vcmp.gt.f32.partialorder %v1526, 29.0
          %vm1528 = vcmp.ne.f32.partialorder %v1517, %v1517
          %v1529 = vmul.f32 %v1517, 16.0
          %v1530 = vsel %vm1528, -0.0, %v1529
          %v1531 = vsel %vm1527, nan, %v1530
          %v1532 = vand.u32 2147483647, %v1518
          %vm1533 = vcmp.gt.f32.partialorder %v1532, 29.0
          %vm1534 = vcmp.ne.f32.partialorder %v1518, %v1518
          %v1535 = vmul.f32 %v1518, 16.0
          %v1536 = vsel %vm1534, -0.0, %v1535
          %v1537 = vsel %vm1533, nan, %v1536
          %v1538 = vand.u32 2147483647, %v1519
          %vm1539 = vcmp.gt.f32.partialorder %v1538, 29.0
          %vm1540 = vcmp.ne.f32.partialorder %v1519, %v1519
          %v1541 = vmul.f32 %v1519, 16.0
          %v1542 = vsel %vm1540, -0.0, %v1541
          %v1543 = vsel %vm1539, nan, %v1542
        $region84: #{fp8_linear_forward.3} parent=39
          #allocation41 [shape = 'u8[4096]{0}', space=vmem, size = 0x1000, scoped, tag = 'scoped memory for fp8_linear_forward.3']
          %1544 = vst [vmem:[#allocation41] sm:$0xff] %v712
          %s1545 = scalar_lea.vmem [#allocation41], 6
          %v1546 = vld [vmem:[%s1545] sm:$0x3]
          %v1547 = vunpack.c.0.f8e4m3b11 %v1546
          %v1548 = vunpack.c.1.f8e4m3b11 %v1546
          %v1549 = vunpack.c.2.f8e4m3b11 %v1546
          %v1550 = vunpack.c.3.f8e4m3b11 %v1546
          %v1551 = vand.u32 2147483647, %v1547
          %vm1552 = vcmp.gt.f32.partialorder %v1551, 29.0
          %vm1553 = vcmp.ne.f32.partialorder %v1547, %v1547
          %v1554 = vmul.f32 %v1547, 16.0
          %v1555 = vsel %vm1553, -0.0, %v1554
          %v1556 = vsel %vm1552, nan, %v1555
          %v1557 = vand.u32 2147483647, %v1548
          %vm1558 = vcmp.gt.f32.partialorder %v1557, 29.0
          %vm1559 = vcmp.ne.f32.partialorder %v1548, %v1548
          %v1560 = vmul.f32 %v1548, 16.0
          %v1561 = vsel %vm1559, -0.0, %v1560
          %v1562 = vsel %vm1558, nan, %v1561
          %v1563 = vand.u32 2147483647, %v1549
          %vm1564 = vcmp.gt.f32.partialorder %v1563, 29.0
          %vm1565 = vcmp.ne.f32.partialorder %v1549, %v1549
          %v1566 = vmul.f32 %v1549, 16.0
          %v1567 = vsel %vm1565, -0.0, %v1566
          %v1568 = vsel %vm1564, nan, %v1567
          %v1569 = vand.u32 2147483647, %v1550
          %vm1570 = vcmp.gt.f32.partialorder %v1569, 29.0
          %vm1571 = vcmp.ne.f32.partialorder %v1550, %v1550
          %v1572 = vmul.f32 %v1550, 16.0
          %v1573 = vsel %vm1571, -0.0, %v1572
          %v1574 = vsel %vm1570, nan, %v1573
        $region85: #{fp8_linear_forward.3} parent=39
          #allocation42 [shape = 'u8[4096]{0}', space=vmem, size = 0x1000, scoped, tag = 'scoped memory for fp8_linear_forward.3']
          %1575 = vst [vmem:[#allocation42] sm:$0xff] %v713
          %v1576 = vld [vmem:[#allocation42] sm:$0x3]
          %v1577 = vunpack.c.0.f8e4m3b11 %v1576
          %v1578 = vunpack.c.1.f8e4m3b11 %v1576
          %v1579 = vunpack.c.2.f8e4m3b11 %v1576
          %v1580 = vunpack.c.3.f8e4m3b11 %v1576
          %v1581 = vand.u32 2147483647, %v1577
          %vm1582 = vcmp.gt.f32.partialorder %v1581, 29.0
          %vm1583 = vcmp.ne.f32.partialorder %v1577, %v1577
          %v1584 = vmul.f32 %v1577, 16.0
          %v1585 = vsel %vm1583, -0.0, %v1584
          %v1586 = vsel %vm1582, nan, %v1585
          %v1587 = vand.u32 2147483647, %v1578
          %vm1588 = vcmp.gt.f32.partialorder %v1587, 29.0
          %vm1589 = vcmp.ne.f32.partialorder %v1578, %v1578
          %v1590 = vmul.f32 %v1578, 16.0
          %v1591 = vsel %vm1589, -0.0, %v1590
          %v1592 = vsel %vm1588, nan, %v1591
          %v1593 = vand.u32 2147483647, %v1579
          %vm1594 = vcmp.gt.f32.partialorder %v1593, 29.0
          %vm1595 = vcmp.ne.f32.partialorder %v1579, %v1579
          %v1596 = vmul.f32 %v1579, 16.0
          %v1597 = vsel %vm1595, -0.0, %v1596
          %v1598 = vsel %vm1594, nan, %v1597
          %v1599 = vand.u32 2147483647, %v1580
          %vm1600 = vcmp.gt.f32.partialorder %v1599, 29.0
          %vm1601 = vcmp.ne.f32.partialorder %v1580, %v1580
          %v1602 = vmul.f32 %v1580, 16.0
          %v1603 = vsel %vm1601, -0.0, %v1602
          %v1604 = vsel %vm1600, nan, %v1603
        $region86: #{fp8_linear_forward.3} parent=39
          #allocation43 [shape = 'u8[4096]{0}', space=vmem, size = 0x1000, scoped, tag = 'scoped memory for fp8_linear_forward.3']
          %1605 = vst [vmem:[#allocation43] sm:$0xff] %v713
          %s1606 = scalar_lea.vmem [#allocation43], 2
          %v1607 = vld [vmem:[%s1606] sm:$0x3]
          %v1608 = vunpack.c.0.f8e4m3b11 %v1607
          %v1609 = vunpack.c.1.f8e4m3b11 %v1607
          %v1610 = vunpack.c.2.f8e4m3b11 %v1607
          %v1611 = vunpack.c.3.f8e4m3b11 %v1607
          %v1612 = vand.u32 2147483647, %v1608
          %vm1613 = vcmp.gt.f32.partialorder %v1612, 29.0
          %vm1614 = vcmp.ne.f32.partialorder %v1608, %v1608
          %v1615 = vmul.f32 %v1608, 16.0
          %v1616 = vsel %vm1614, -0.0, %v1615
          %v1617 = vsel %vm1613, nan, %v1616
          %v1618 = vand.u32 2147483647, %v1609
          %vm1619 = vcmp.gt.f32.partialorder %v1618, 29.0
          %vm1620 = vcmp.ne.f32.partialorder %v1609, %v1609
          %v1621 = vmul.f32 %v1609, 16.0
          %v1622 = vsel %vm1620, -0.0, %v1621
          %v1623 = vsel %vm1619, nan, %v1622
          %v1624 = vand.u32 2147483647, %v1610
          %vm1625 = vcmp.gt.f32.partialorder %v1624, 29.0
          %vm1626 = vcmp.ne.f32.partialorder %v1610, %v1610
          %v1627 = vmul.f32 %v1610, 16.0
          %v1628 = vsel %vm1626, -0.0, %v1627
          %v1629 = vsel %vm1625, nan, %v1628
          %v1630 = vand.u32 2147483647, %v1611
          %vm1631 = vcmp.gt.f32.partialorder %v1630, 29.0
          %vm1632 = vcmp.ne.f32.partialorder %v1611, %v1611
          %v1633 = vmul.f32 %v1611, 16.0
          %v1634 = vsel %vm1632, -0.0, %v1633
          %v1635 = vsel %vm1631, nan, %v1634
        $region87: #{fp8_linear_forward.3} parent=39
          #allocation44 [shape = 'u8[4096]{0}', space=vmem, size = 0x1000, scoped, tag = 'scoped memory for fp8_linear_forward.3']
          %1636 = vst [vmem:[#allocation44] sm:$0xff] %v713
          %s1637 = scalar_lea.vmem [#allocation44], 4
          %v1638 = vld [vmem:[%s1637] sm:$0x3]
          %v1639 = vunpack.c.0.f8e4m3b11 %v1638
          %v1640 = vunpack.c.1.f8e4m3b11 %v1638
          %v1641 = vunpack.c.2.f8e4m3b11 %v1638
          %v1642 = vunpack.c.3.f8e4m3b11 %v1638
          %v1643 = vand.u32 2147483647, %v1639
          %vm1644 = vcmp.gt.f32.partialorder %v1643, 29.0
          %vm1645 = vcmp.ne.f32.partialorder %v1639, %v1639
          %v1646 = vmul.f32 %v1639, 16.0
          %v1647 = vsel %vm1645, -0.0, %v1646
          %v1648 = vsel %vm1644, nan, %v1647
          %v1649 = vand.u32 2147483647, %v1640
          %vm1650 = vcmp.gt.f32.partialorder %v1649, 29.0
          %vm1651 = vcmp.ne.f32.partialorder %v1640, %v1640
          %v1652 = vmul.f32 %v1640, 16.0
          %v1653 = vsel %vm1651, -0.0, %v1652
          %v1654 = vsel %vm1650, nan, %v1653
          %v1655 = vand.u32 2147483647, %v1641
          %vm1656 = vcmp.gt.f32.partialorder %v1655, 29.0
          %vm1657 = vcmp.ne.f32.partialorder %v1641, %v1641
          %v1658 = vmul.f32 %v1641, 16.0
          %v1659 = vsel %vm1657, -0.0, %v1658
          %v1660 = vsel %vm1656, nan, %v1659
          %v1661 = vand.u32 2147483647, %v1642
          %vm1662 = vcmp.gt.f32.partialorder %v1661, 29.0
          %vm1663 = vcmp.ne.f32.partialorder %v1642, %v1642
          %v1664 = vmul.f32 %v1642, 16.0
          %v1665 = vsel %vm1663, -0.0, %v1664
          %v1666 = vsel %vm1662, nan, %v1665
        $region88: #{fp8_linear_forward.3} parent=39
          #allocation45 [shape = 'u8[4096]{0}', space=vmem, size = 0x1000, scoped, tag = 'scoped memory for fp8_linear_forward.3']
          %1667 = vst [vmem:[#allocation45] sm:$0xff] %v713
          %s1668 = scalar_lea.vmem [#allocation45], 6
          %v1669 = vld [vmem:[%s1668] sm:$0x3]
          %v1670 = vunpack.c.0.f8e4m3b11 %v1669
          %v1671 = vunpack.c.1.f8e4m3b11 %v1669
          %v1672 = vunpack.c.2.f8e4m3b11 %v1669
          %v1673 = vunpack.c.3.f8e4m3b11 %v1669
          %v1674 = vand.u32 2147483647, %v1670
          %vm1675 = vcmp.gt.f32.partialorder %v1674, 29.0
          %vm1676 = vcmp.ne.f32.partialorder %v1670, %v1670
          %v1677 = vmul.f32 %v1670, 16.0
          %v1678 = vsel %vm1676, -0.0, %v1677
          %v1679 = vsel %vm1675, nan, %v1678
          %v1680 = vand.u32 2147483647, %v1671
          %vm1681 = vcmp.gt.f32.partialorder %v1680, 29.0
          %vm1682 = vcmp.ne.f32.partialorder %v1671, %v1671
          %v1683 = vmul.f32 %v1671, 16.0
          %v1684 = vsel %vm1682, -0.0, %v1683
          %v1685 = vsel %vm1681, nan, %v1684
          %v1686 = vand.u32 2147483647, %v1672
          %vm1687 = vcmp.gt.f32.partialorder %v1686, 29.0
          %vm1688 = vcmp.ne.f32.partialorder %v1672, %v1672
          %v1689 = vmul.f32 %v1672, 16.0
          %v1690 = vsel %vm1688, -0.0, %v1689
          %v1691 = vsel %vm1687, nan, %v1690
          %v1692 = vand.u32 2147483647, %v1673
          %vm1693 = vcmp.gt.f32.partialorder %v1692, 29.0
          %vm1694 = vcmp.ne.f32.partialorder %v1673, %v1673
          %v1695 = vmul.f32 %v1673, 16.0
          %v1696 = vsel %vm1694, -0.0, %v1695
          %v1697 = vsel %vm1693, nan, %v1696
        %v1698 = vpack.c.bf16 %v756, %v725
        %v1699 = vpack.c.bf16 %v818, %v787
        %v1700 = vpack.c.bf16 %v879, %v848
        %v1701 = vpack.c.bf16 %v941, %v910
        %v1702 = vpack.c.bf16 %v1002, %v971
        %v1703 = vpack.c.bf16 %v1064, %v1033
        %v1704 = vpack.c.bf16 %v1125, %v1094
        %v1705 = vpack.c.bf16 %v1187, %v1156
        %v1706 = vpack.c.bf16 %v1248, %v1217
        %v1707 = vpack.c.bf16 %v1310, %v1279
        %v1708 = vpack.c.bf16 %v1371, %v1340
        %v1709 = vpack.c.bf16 %v1433, %v1402
        %v1710 = vpack.c.bf16 %v1494, %v1463
        %v1711 = vpack.c.bf16 %v1556, %v1525
        %v1712 = vpack.c.bf16 %v1617, %v1586
        %v1713 = vpack.c.bf16 %v1679, %v1648
        %v1714 = vld [vmem:[#allocation2] sm:$0xff]
        %v1715 = vld [vmem:[#allocation2 + $0x8] sm:$0xff]
        %v1716 = vld [vmem:[#allocation2 + $0x10] sm:$0xff]
        %v1717 = vld [vmem:[#allocation2 + $0x18] sm:$0xff]
        %1718 = vmatpush.bf16.msra.mxu0 %v1705
        %1719 = vmatpush.bf16.msra.mxu0 %v1704
        %1720 = vmatpush.bf16.msra.mxu0 %v1703
        %1721 = vmatpush.bf16.msra.mxu0 %v1702
        %1722 = vmatpush.bf16.msra.mxu0 %v1701
        %1723 = vmatpush.bf16.msra.mxu0 %v1700
        %1724 = vmatpush.bf16.msra.mxu0 %v1699
        %1725 = vmatpush.bf16.msra.mxu0 %v1698
        %1726 = vmatmul.bf16.gmra.mxu0 %v690
        %v1727 = vpop.f32.mrf.mxu0
        %v1728 = vadd.f32 0.0, %v1727
        %v1729 = vpop.f32.mrf.mxu0
        %v1730 = vadd.f32 0.0, %v1729
        %1731 = vmatmul.bf16.gmra.mxu0 %v691
        %v1732 = vpop.f32.mrf.mxu0
        %v1733 = vadd.f32 0.0, %v1732
        %v1734 = vpop.f32.mrf.mxu0
        %v1735 = vadd.f32 0.0, %v1734
        %1736 = vdwg.mxu0
        %1737 = vmatpush.bf16.msra.mxu0 %v1713
        %1738 = vmatpush.bf16.msra.mxu0 %v1712
        %1739 = vmatpush.bf16.msra.mxu0 %v1711
        %1740 = vmatpush.bf16.msra.mxu0 %v1710
        %1741 = vmatpush.bf16.msra.mxu0 %v1709
        %1742 = vmatpush.bf16.msra.mxu0 %v1708
        %1743 = vmatpush.bf16.msra.mxu0 %v1707
        %1744 = vmatpush.bf16.msra.mxu0 %v1706
        %1745 = vmatmul.bf16.gmra.mxu0 %v702
        %v1746 = vpop.f32.mrf.mxu0
        %v1747 = vadd.f32 %v1728, %v1746
        %v1748 = vpop.f32.mrf.mxu0
        %v1749 = vadd.f32 %v1730, %v1748
        %1750 = vmatmul.bf16.gmra.mxu0 %v703
        %v1751 = vpop.f32.mrf.mxu0
        %v1752 = vadd.f32 %v1733, %v1751
        %v1753 = vpop.f32.mrf.mxu0
        %v1754 = vadd.f32 %v1735, %v1753
        %1755 = vdwg.mxu0
        %v1756 = vadd.f32 %v1714, %v1747
        %v1757 = vadd.f32 %v1715, %v1749
        %v1758 = vadd.f32 %v1716, %v1752
        %v1759 = vadd.f32 %v1717, %v1754
        %1760 = vst [vmem:[#allocation2] sm:$0xff] %v1756
        %1761 = vst [vmem:[#allocation2 + $0x8] sm:$0xff] %v1757
        %1762 = vst [vmem:[#allocation2 + $0x10] sm:$0xff] %v1758
        %1763 = vst [vmem:[#allocation2 + $0x18] sm:$0xff] %v1759
        // Predicated region
        $region89: #{fp8_linear_forward.3} parent=39 // pred_check
          %p1764 = pneg %p354
        $region90: #{fp8_linear_forward.3} parent=39 // pred_check_branch
          %1766 = sbr.rel (%p1764) target = $region92
        $region91: #{fp8_linear_forward.3} parent=39 // pred_region
          %v1767 = vld [vmem:[#allocation2] sm:$0xff]
          %v1768 = vld [vmem:[#allocation2 + $0x8] sm:$0xff]
          %v1769 = vld [vmem:[#allocation2 + $0x10] sm:$0xff]
          %v1770 = vld [vmem:[#allocation2 + $0x18] sm:$0xff]
          %v1771 = vld [vmem:[%s349] sm:$0x1]
          %v1773 = vperm.slane %v1771, 0
          %v1775 = vmul.f32 %v1767, %v1773
          %v1776 = vmul.f32 %v1768, %v1773
          %v1777 = vmul.f32 %v1769, %v1773
          %v1778 = vmul.f32 %v1770, %v1773
          %v1779 = vld [vmem:[%s352] sm:$0x1]
          %v1781 = vperm.slane %v1779, 0
          %v1783 = vadd.f32 %v1775, %v1781
          %v1784 = vadd.f32 %v1776, %v1781
          %v1785 = vadd.f32 %v1777, %v1781
          %v1786 = vadd.f32 %v1778, %v1781
          %1787 = vst [vmem:[%s329] sm:$0xff] %v1783
          %1788 = vst [vmem:[%s329 + $0x8] sm:$0xff] %v1784
          %1789 = vst [vmem:[%s329 + $0x10] sm:$0xff] %v1785
          %1790 = vst [vmem:[%s329 + $0x18] sm:$0xff] %v1786
        $region92: #{fp8_linear_forward.3} parent=39 // pred_fallthru
          _
        %s1791 = sand.u32 %s182, 1
        %s1792 = sand.u32 %s182, 1
        %s1793 = smul.addr %s1792, 32
        %s1794 = scalar_lea.vmem [#allocation5], %s1793
        // Predicated region
        $region93: #{fp8_linear_forward.3} parent=39 // pred_check
          %p1795 = pneg %p192
        $region94: #{fp8_linear_forward.3} parent=39 // pred_check_branch
          %1797 = sbr.rel (%p1795) target = $region96
        $region95: #{fp8_linear_forward.3} parent=39 // pred_region
          %s1798 = smul.u32 4, %s24
          %s1799 = smul.addr %s1798, 2
          %s1800 = sadd.s32 %s25, %s1799
          %s1801 = smul.addr %s1800, 8
          %s1802 = scalar_lea.vmem %s5, %s1801
          // Predicated region
          $region97: #{fp8_linear_forward.3} parent=95 // pred_check
            _
          $region98: #{fp8_linear_forward.3} parent=95 // pred_check_branch
            %1804 = sbr.rel (0) target = $region100
          $region99: #{fp8_linear_forward.3} parent=95 // pred_region
            // Predicated region
            $region101: #{fp8_linear_forward.3} parent=99 // pred_check
              _
            $region102: #{fp8_linear_forward.3} parent=99 // pred_check_branch
              %1806 = sbr.rel (0) target = $region104
            $region103: #{fp8_linear_forward.3} parent=99 // pred_region
              // Predicated region
              $region116: #{fp8_linear_forward.3} parent=103 // pred_check
                _
              $region117: #{fp8_linear_forward.3} parent=103 // pred_check_branch
                %1828 = sbr.rel (0) target = $region119
              $region118: #{fp8_linear_forward.3} parent=103 // pred_region
                loop: start=0, step=1, limit=1
                $region120: #{fp8_linear_forward.3} parent=118 // loop_pre_header
                  _
                $region121: #{fp8_linear_forward.3} parent=118 // loop_header
                  %s1830 = sphi 0, %s1834
                  %p1831 = scmp.ge.s32.totalorder %s1830, 1
                  %s1835 = sphi %s1794, %s1794
                  %s1836 = sphi %s1802, %s1802
                $region122: #{fp8_linear_forward.3} parent=118 // loop_header_branch
                  %1833 = sbr.rel (%p1831) target = $region126
                $region123: #{fp8_linear_forward.3} parent=118 // loop_body
                  %v1837 = vld [vmem:[%s1835] sm:$0xff]
                  %1838 = vst [vmem:[%s1836] sm:$0xff] %v1837
                  %v1839 = vld [vmem:[%s1835 + $0x8] sm:$0xff]
                  %1840 = vst [vmem:[%s1836 + $0x10] sm:$0xff] %v1839
                  %v1841 = vld [vmem:[%s1835 + $0x10] sm:$0xff]
                  %1842 = vst [vmem:[%s1836 + $0x20] sm:$0xff] %v1841
                  %v1843 = vld [vmem:[%s1835 + $0x18] sm:$0xff]
                  %1844 = vst [vmem:[%s1836 + $0x30] sm:$0xff] %v1843
                $region124: #{fp8_linear_forward.3} parent=118 // loop_footer
                  %s1834 = sadd.s32 1, %s1830
                $region125: #{fp8_linear_forward.3} parent=118 // loop_footer_branch
                  %1829 = sbr.rel target = $region121
                $region126: #{fp8_linear_forward.3} parent=118 // loop_exit
                  _
              $region119: #{fp8_linear_forward.3} parent=103 // pred_fallthru
                _
              // Predicated region
              $region127: #{fp8_linear_forward.3} parent=103 // pred_check
                _
              $region128: #{fp8_linear_forward.3} parent=103 // pred_check_branch
                %1846 = sbr.rel target = $region130
              $region129: #{fp8_linear_forward.3} parent=103 // pred_region
                _
              $region130: #{fp8_linear_forward.3} parent=103 // pred_fallthru
                _
            $region104: #{fp8_linear_forward.3} parent=99 // pred_fallthru
              _
            // Predicated region
            $region105: #{fp8_linear_forward.3} parent=99 // pred_check
              _
            $region106: #{fp8_linear_forward.3} parent=99 // pred_check_branch
              %1808 = sbr.rel target = $region108
            $region107: #{fp8_linear_forward.3} parent=99 // pred_region
              %s1810 = ssub.s32 256, 1
              loop: start=0, step=1, limit=1
              $region109: #{fp8_linear_forward.3} parent=107 // loop_pre_header
                _
              $region110: #{fp8_linear_forward.3} parent=107 // loop_header
                %s1812 = sphi 0, %s1816
                %p1813 = scmp.ge.s32.totalorder %s1812, 1
                %s1817 = sphi %s1794, %s1794
                %s1818 = sphi %s1802, %s1802
              $region111: #{fp8_linear_forward.3} parent=107 // loop_header_branch
                %1815 = sbr.rel (%p1813) target = $region115
              $region112: #{fp8_linear_forward.3} parent=107 // loop_body
                %v1819 = vld [vmem:[%s1817] sm:%s1810]
                %1820 = vst [vmem:[%s1818] sm:%s1810] %v1819
                %v1821 = vld [vmem:[%s1817 + $0x8] sm:%s1810]
                %1822 = vst [vmem:[%s1818 + $0x10] sm:%s1810] %v1821
                %v1823 = vld [vmem:[%s1817 + $0x10] sm:%s1810]
                %1824 = vst [vmem:[%s1818 + $0x20] sm:%s1810] %v1823
                %v1825 = vld [vmem:[%s1817 + $0x18] sm:%s1810]
                %1826 = vst [vmem:[%s1818 + $0x30] sm:%s1810] %v1825
              $region113: #{fp8_linear_forward.3} parent=107 // loop_footer
                %s1816 = sadd.s32 1, %s1812
              $region114: #{fp8_linear_forward.3} parent=107 // loop_footer_branch
                %1811 = sbr.rel target = $region110
              $region115: #{fp8_linear_forward.3} parent=107 // loop_exit
                _
            $region108: #{fp8_linear_forward.3} parent=99 // pred_fallthru
              _
          $region100: #{fp8_linear_forward.3} parent=95 // pred_fallthru
            _
          %1847 = vnop
        $region96: #{fp8_linear_forward.3} parent=39 // pred_fallthru
          _
      $region40: #{fp8_linear_forward.3} parent=5 // pred_fallthru
        _
      %p1848 = scmp.le.s32.totalorder 2, %s14
      // Predicated region
      $region131: #{fp8_linear_forward.3} parent=5 // pred_check
        %p1849 = pneg %p1848
      $region132: #{fp8_linear_forward.3} parent=5 // pred_check_branch
        %1851 = sbr.rel (%p1849) target = $region134
      $region133: #{fp8_linear_forward.3} parent=5 // pred_region
        %s1852 = ssub.s32 %s14, 2
        // Predicated region
        $region135: #{fp8_linear_forward.3} parent=133 // pred_check
          %p1853 = pneg %p198
        $region136: #{fp8_linear_forward.3} parent=133 // pred_check_branch
          %1855 = sbr.rel (%p1853) target = $region138
        $region137: #{fp8_linear_forward.3} parent=133 // pred_region
          %s1856 = sand.u32 %s183, 1
          %s1857 = sand.u32 %s183, 1
          %s1858 = smul.addr %s1857, 32
          %s1859 = scalar_lea.vmem [#allocation5], %s1858
        $region138: #{fp8_linear_forward.3} parent=133 // pred_fallthru
          _
      $region134: #{fp8_linear_forward.3} parent=5 // pred_fallthru
        _
    $region6: #{fp8_linear_forward.3} parent=1 // loop_footer
      %s18 = sadd.s32 1, %s14
    $region7: #{fp8_linear_forward.3} parent=1 // loop_footer_branch
      %13 = sbr.rel target = $region3
    $region8: #{fp8_linear_forward.3} parent=1 // loop_exit
      _
    %1860 = vsyncpa [#allocation4], 1
    %s1861 = scalar_lea.sflag [#allocation4], 1
    %1862 = vsyncpa %s1861, 1

</llo_original>
